<compile_context>
chip_gen: v7x
topology: tpu7x:2x2x1
jax: 0.10.0
libtpu: 0.0.40
codegen_flags: <defaults>
</compile_context>

<pallas_src>
import functools

import jax
import jax.numpy as jnp
import numpy as np
from jax import lax
from jax.experimental import pallas as pl
from jax.experimental.pallas import tpu as pltpu


def _rup(v, m):
    return (v + m - 1) // m * m


# ----------------------------------------------------------------------------
# Host-side packing (done once per parameter set; review item: keep it off the
# per-call path).  cor_w and the stacked pe_to_coeff weights are fused into one
# block so the kernel can do a single [*, pe_hid] x [pe_hid, pe_hid+K+1] dot.
# ----------------------------------------------------------------------------
def pack_dsf_gpr_params(params, K):
    corpe_w = jnp.concatenate([params["cor_w"], params["pe2c_wT"]], axis=1)
    blocks = [
        ("lin1_w", params["lin1_w"]),     # [in_dim, hid]
        ("lin2_w", params["lin2_w"]),     # [hid, out]
        ("pelin_w", params["pelin_w"]),   # [PE_in, PE_hid]
        ("corpe_w", corpe_w),             # [PE_hid, PE_hid + K + 1]
    ]
    bias_rows = [
        params["lin1_b"], params["lin2_b"], params["pelin_b"], params["cor_b"],
        params["temp"].reshape(1, K + 1), params["pe2c_b"].reshape(1, K + 1),
    ]
    width = max([b.shape[1] for _, b in blocks] + [b.shape[1] for b in bias_rows])
    offs, rows, r = {}, [], 0
    for name, w in blocks:
        offs[name] = r
        h, c = w.shape
        ph = _rup(h, 8)                   # keep every block sublane-aligned
        rows.append(jnp.zeros((ph, width), jnp.float32).at[:h, :c].set(w))
        r += ph
    offs["bias"] = r
    pb = _rup(len(bias_rows), 8)
    bblk = jnp.zeros((pb, width), jnp.float32)
    for i, b in enumerate(bias_rows):
        v = jnp.asarray(b, jnp.float32).reshape(-1)
        bblk = bblk.at[i, :v.shape[0]].set(v)
    rows.append(bblk)
    slab = jnp.concatenate(rows, axis=0)
    return slab, offs


# ----------------------------------------------------------------------------
# Path 1: gridless, A fully VMEM-resident (small / medium N)
# ----------------------------------------------------------------------------
def _dsf_gpr_fused_kernel(
    x_ref, pe_in_ref, A_ref, w_ref, out_ref, xp_ref, *,
    K, pe_alpha, pe_beta, in_dim, hid_dim, out_dim,
    pe_in_dim, pe_hid_dim, offs, out_pad,
):
    f32 = jnp.float32
    N = x_ref.shape[0]
    F = pe_hid_dim + out_dim
    o = offs

    # hoisted parameter views (static slices of the packed slab)
    lin1_w = w_ref[o["lin1_w"]:o["lin1_w"] + in_dim, 0:hid_dim]
    lin2_w = w_ref[o["lin2_w"]:o["lin2_w"] + hid_dim, 0:out_dim]
    pelin_w = w_ref[o["pelin_w"]:o["pelin_w"] + pe_in_dim, 0:pe_hid_dim]
    corpe_w = w_ref[o["corpe_w"]:o["corpe_w"] + pe_hid_dim, 0:pe_hid_dim + K + 1]
    ob = o["bias"]
    lin1_b = w_ref[ob + 0:ob + 1, 0:hid_dim]
    lin2_b = w_ref[ob + 1:ob + 2, 0:out_dim]
    pelin_b = w_ref[ob + 2:ob + 3, 0:pe_hid_dim]
    cor_b = w_ref[ob + 3:ob + 4, 0:pe_hid_dim]
    temp_r = w_ref[ob + 4:ob + 5, 0:K + 1]
    peb_r = w_ref[ob + 5:ob + 6, 0:K + 1]
    cor_b_bc = jnp.broadcast_to(cor_b, (N, pe_hid_dim))   # hoisted broadcast

    A = A_ref[...]

    # MLP heads (dropout / PE_dropout / dprate are eval-mode identities)
    pe = jnp.tanh(
        jnp.dot(pe_in_ref[...], pelin_w, preferred_element_type=f32)
        + jnp.broadcast_to(pelin_b, (N, pe_hid_dim)))
    h = jnp.maximum(
        jnp.dot(x_ref[...], lin1_w, preferred_element_type=f32)
        + jnp.broadcast_to(lin1_b, (N, hid_dim)), 0.0)
    x = (jnp.dot(h, lin2_w, preferred_element_type=f32)
         + jnp.broadcast_to(lin2_b, (N, out_dim)))
    raw_pe = pe

    # Fused propagation operand [pe | x | 0-pad] kept in a lane-aligned VMEM
    # slab; slice stores instead of concatenates (review item 2).
    xp_ref[:, 0:pe_hid_dim] = pe
    xp_ref[:, pe_hid_dim:F] = x
    if out_pad > F:
        xp_ref[:, F:out_pad] = jnp.zeros((N, out_pad - F), f32)
    hidden = jnp.zeros((N, out_pad), f32)

    for k in range(K):                                    # static -> unrolled
        xp = xp_ref[...]                                  # [N, out_pad]
        # one fused MXU pass: [cor_w | pe2c_wT]  (review item 1)
        cpl = jnp.dot(pe, corpe_w, preferred_element_type=f32)
        cp = cpl[:, 0:pe_hid_dim] + cor_b_bc
        lg = cpl[:, pe_hid_dim + k:pe_hid_dim + k + 1] + peb_r[0:1, k:k + 1]
        gamma = temp_r[0:1, k:k + 1] * jnp.tanh(lg)       # gamma_k (uses pe_k)
        hidden = hidden + gamma * xp                      # pe-cols fixed at end

        # single A pass per step over the fused [pe | x] operand
        xp_prop = jnp.dot(A, xp, preferred_element_type=f32)   # [N, out_pad]
        pe_adj = jax.nn.sigmoid(
            lax.dot_general(cp, cp, (((1,), (1,)), ((), ())),   # cp @ cp.T
                            preferred_element_type=f32))
        pe_corr = jnp.dot(pe_adj, pe, preferred_element_type=f32)
        pe_tpo = xp_prop[:, 0:pe_hid_dim]
        pe = (1.0 + pe_beta) * pe_tpo - pe_beta * pe_corr
        pe = pe_alpha * raw_pe + (1.0 - pe_alpha) * pe
        pe = jnp.tanh(pe)

        xp_ref[...] = xp_prop                              # carry x columns
        xp_ref[:, 0:pe_hid_dim] = pe                       # overwrite pe cols

    # final gamma_K term (static column K of the fused block)
    xp = xp_ref[...]
    lgK = (jnp.dot(pe, corpe_w[:, pe_hid_dim + K:pe_hid_dim + K + 1],
                   preferred_element_type=f32) + peb_r[0:1, K:K + 1])
    gK = temp_r[0:1, K:K + 1] * jnp.tanh(lgK)
    hidden = hidden + gK * xp

    # lane-dense 128-wide store; pe-columns of hidden are dummies -> overwrite
    out_ref[...] = hidden
    out_ref[:, 0:pe_hid_dim] = pe


def dsf_gpr_i_forward(x, pos_enc, A_hat, w_slab, offs, dims, *,
                      pe_alpha, pe_beta):
    N, in_dim = x.shape
    pe_in_dim = pos_enc.shape[1]
    K = dims["K"]
    hid_dim, out_dim, pe_hid_dim = dims["hid_dim"], dims["out_dim"], dims["pe_hid_dim"]
    F = pe_hid_dim + out_dim
    out_pad = _rup(F, 128)

    kernel = functools.partial(
        _dsf_gpr_fused_kernel, K=K, pe_alpha=pe_alpha, pe_beta=pe_beta,
        in_dim=in_dim, hid_dim=hid_dim, out_dim=out_dim,
        pe_in_dim=pe_in_dim, pe_hid_dim=pe_hid_dim, offs=offs, out_pad=out_pad)

    vmem = pl.BlockSpec(memory_space=pltpu.MemorySpace.VMEM)
    flops = int(2 * N * (in_dim * hid_dim + hid_dim * out_dim + pe_in_dim * pe_hid_dim)
                + K * (2 * N * N * out_pad + 4 * N * N * pe_hid_dim
                       + 2 * N * pe_hid_dim * (pe_hid_dim + K + 1)))
    trans = int(K * N * N + (K + 2) * N * pe_hid_dim + (K + 1) * N)
    nbytes = int(4 * (N * N + N * (in_dim + pe_in_dim + out_pad) + w_slab.size))

    out = pl.pallas_call(
        kernel,
        out_shape=jax.ShapeDtypeStruct((N, out_pad), jnp.float32),
        in_specs=[vmem, vmem, vmem, vmem],
        out_specs=vmem,
        scratch_shapes=[pltpu.VMEM((N, out_pad), jnp.float32)],
        compiler_params=pltpu.CompilerParams(
            vmem_limit_bytes=32 * 1024 * 1024),
        cost_estimate=pl.CostEstimate(flops=flops, transcendentals=trans,
                                      bytes_accessed=nbytes),
    )(x, pos_enc, A_hat, w_slab)
    return out[:, pe_hid_dim:pe_hid_dim + out_dim], out[:, :pe_hid_dim]


# ----------------------------------------------------------------------------
# Path 2: row-tiled grid (step axis outer, row tiles inner) for non-toy N.
# ----------------------------------------------------------------------------
def _dsf_gpr_tiled_kernel(
    x_ref,      # [TILE_M, in_dim]
    pe_in_ref,  # [TILE_M, PE_in]
    A_ref,      # [TILE_M, N]     (mxu_dtype)
    w_ref,      # packed slab     (f32)
    out_ref,    # [TILE_M, out_pad]
    xp_buf,     # VMEM (2*N, F)   ping-pong [pe | x] state, shared by all tiles
    pe0_buf,    # VMEM (N, pe_hid) raw pe (pe_0)
    hid_buf,    # VMEM (N, out_dim) hidden accumulator
    *,
    K, pe_alpha, pe_beta, in_dim, hid_dim, out_dim,
    pe_in_dim, pe_hid_dim, offs, tile_m, n_nodes, out_pad, mxu_dtype,
):
    f32 = jnp.float32
    F = pe_hid_dim + out_dim
    N = n_nodes
    o = offs
    s = pl.program_id(0)          # 0 = MLP heads, 1..K = propagation steps
    i = pl.program_id(1)          # row tile
    r0 = pl.multiple_of(i * tile_m, tile_m)

    def mdot(a, b):
        return jnp.dot(a.astype(mxu_dtype), b.astype(mxu_dtype),
                       preferred_element_type=f32)

    corpe_w = w_ref[o["corpe_w"]:o["corpe_w"] + pe_hid_dim, 0:pe_hid_dim + K + 1]
    ob = o["bias"]
    cor_b = w_ref[ob + 3:ob + 4, 0:pe_hid_dim]
    temp_r = w_ref[ob + 4:ob + 5, 0:K + 1]
    peb_r = w_ref[ob + 5:ob + 6, 0:K + 1]

    @pl.when(s == 0)
    def _heads():
        # MLP heads for this row tile; A-tile DMA'd but unused this step.
        # TODO(synk): skip the A fetch at s==0 via manual DMA / pl.Buffered.
        lin1_w = w_ref[o["lin1_w"]:o["lin1_w"] + in_dim, 0:hid_dim]
        lin2_w = w_ref[o["lin2_w"]:o["lin2_w"] + hid_dim, 0:out_dim]
        pelin_w = w_ref[o["pelin_w"]:o["pelin_w"] + pe_in_dim, 0:pe_hid_dim]
        lin1_b = w_ref[ob + 0:ob + 1, 0:hid_dim]
        lin2_b = w_ref[ob + 1:ob + 2, 0:out_dim]
        pelin_b = w_ref[ob + 2:ob + 3, 0:pe_hid_dim]

        pe0 = jnp.tanh(
            jnp.dot(pe_in_ref[...], pelin_w, preferred_element_type=f32)
            + jnp.broadcast_to(pelin_b, (tile_m, pe_hid_dim)))
        h = jnp.maximum(
            jnp.dot(x_ref[...], lin1_w, preferred_element_type=f32)
            + jnp.broadcast_to(lin1_b, (tile_m, hid_dim)), 0.0)
        x0 = (jnp.dot(h, lin2_w, preferred_element_type=f32)
              + jnp.broadcast_to(lin2_b, (tile_m, out_dim)))

        hid_buf[pl.ds(r0, tile_m), :] = jnp.zeros((tile_m, out_dim), f32)
        pe0_buf[pl.ds(r0, tile_m), :] = pe0
        # xp_0 into ping-pong slot 0 (lane-aligned slice stores, no concat)
        xp_buf[pl.ds(r0, tile_m), 0:pe_hid_dim] = pe0
        xp_buf[pl.ds(r0, tile_m), pe_hid_dim:F] = x0

    @pl.when(s > 0)
    def _step():
        prev_off = pl.multiple_of(((s + 1) % 2) * N, 8)    # slot of state s-1
        cur_off = pl.multiple_of((s % 2) * N, 8)           # slot of state s
        row_prev_t = pl.multiple_of(prev_off + r0, 8)
        row_cur_t = pl.multiple_of(cur_off + r0, 8)

        xp_prev_full = xp_buf[pl.ds(prev_off, N), :]            # [N, F]
        pe_prev_full = xp_prev_full[:, 0:pe_hid_dim]
        xp_prev_t = xp_buf[pl.ds(row_prev_t, tile_m), :]        # [TILE_M, F]
        pe_prev_t = xp_prev_t[:, 0:pe_hid_dim]
        x_prev_t = xp_prev_t[:, pe_hid_dim:F]
        raw_pe_t = pe0_buf[pl.ds(r0, tile_m), :]

        # fused correlation + gamma dot on pe_{s-1} (review item 1)
        cpl = jnp.dot(pe_prev_t, corpe_w, preferred_element_type=f32)
        cp_t = cpl[:, 0:pe_hid_dim] + cor_b
        lg_all = cpl[:, pe_hid_dim:pe_hid_dim + K + 1]           # [TILE_M, K+1]

        # gamma_{s-1} * x_{s-1}: dynamic column -> one-hot select (no dynamic
        # lane slicing); extra tanh columns ride within the same vreg row.
        gam_all = temp_r * jnp.tanh(lg_all + peb_r)
        col = lax.broadcasted_iota(jnp.int32, (tile_m, K + 1), 1)
        g_prev = jnp.sum(jnp.where(col == s - 1, gam_all, 0.0),
                         axis=1, keepdims=True)
        hid_t = hid_buf[pl.ds(r0, tile_m), :] + g_prev * x_prev_t
        hid_buf[pl.ds(r0, tile_m), :] = hid_t

        # global cp (cheap recompute; tiny vs the A-tile matmul)
        cp_full = (jnp.dot(pe_prev_full, corpe_w[:, 0:pe_hid_dim],
                           preferred_element_type=f32) + cor_b)

        # big MXU work (bf16 operands with f32 accumulation when requested)
        xp_prop_t = mdot(A_ref[...], xp_prev_full)               # [TILE_M, F]
        scores = lax.dot_general(
            cp_t.astype(mxu_dtype), cp_full.astype(mxu_dtype),
            (((1,), (1,)), ((), ())), preferred_element_type=f32)  # [TILE_M, N]
        pe_adj_t = jax.nn.sigmoid(scores.astype(mxu_dtype))      # bf16 EUP path
        pe_corr_t = mdot(pe_adj_t, pe_prev_full)                 # [TILE_M, pe_hid]

        pe_tpo_t = xp_prop_t[:, 0:pe_hid_dim]
        x_new_t = xp_prop_t[:, pe_hid_dim:F]
        pe_new_t = (1.0 + pe_beta) * pe_tpo_t - pe_beta * pe_corr_t
        pe_new_t = pe_alpha * raw_pe_t + (1.0 - pe_alpha) * pe_new_t
        pe_new_t = jnp.tanh(pe_new_t)

        # write state s for this tile (lane-aligned slice stores, no concat)
        xp_buf[pl.ds(row_cur_t, tile_m), 0:pe_hid_dim] = pe_new_t
        xp_buf[pl.ds(row_cur_t, tile_m), pe_hid_dim:F] = x_new_t

        @pl.when(s == K)
        def _finalize():
            lgK = (jnp.dot(pe_new_t,
                           corpe_w[:, pe_hid_dim + K:pe_hid_dim + K + 1],
                           preferred_element_type=f32) + peb_r[0:1, K:K + 1])
            gK = temp_r[0:1, K:K + 1] * jnp.tanh(lgK)
            hid_final = hid_t + gK * x_new_t
            out_ref[:, 0:pe_hid_dim] = pe_new_t
            out_ref[:, pe_hid_dim:F] = hid_final
            if out_pad > F:
                out_ref[:, F:out_pad] = jnp.zeros((tile_m, out_pad - F), f32)


def dsf_gpr_i_forward_tiled(x, pos_enc, A_hat, w_slab, offs, dims, *,
                            pe_alpha, pe_beta, tile_m=128,
                            mxu_dtype=jnp.float32):
    N, in_dim = x.shape
    pe_in_dim = pos_enc.shape[1]
    K = dims["K"]
    hid_dim, out_dim, pe_hid_dim = dims["hid_dim"], dims["out_dim"], dims["pe_hid_dim"]
    assert K >= 1
    assert N % tile_m == 0, "row-tiled path expects N to be a multiple of tile_m"
    T = N // tile_m
    F = pe_hid_dim + out_dim
    out_pad = _rup(F, 128)

    A_in = A_hat.astype(mxu_dtype)   # bf16 A: half the HBM traffic (v6e/v7x)

    kernel = functools.partial(
        _dsf_gpr_tiled_kernel, K=K, pe_alpha=pe_alpha, pe_beta=pe_beta,
        in_dim=in_dim, hid_dim=hid_dim, out_dim=out_dim,
        pe_in_dim=pe_in_dim, pe_hid_dim=pe_hid_dim, offs=offs,
        tile_m=tile_m, n_nodes=N, out_pad=out_pad, mxu_dtype=mxu_dtype)

    a_bytes = jnp.dtype(mxu_dtype).itemsize
    flops = int(K * (2 * N * N * F + 4 * N * N * pe_hid_dim)
                + 2 * N * (in_dim * hid_dim + hid_dim * out_dim
                           + pe_in_dim * pe_hid_dim))
    trans = int(K * N * N + (K + 2) * N * pe_hid_dim)
    nbytes = int((K + 1) * N * N * a_bytes
                 + 4 * (N * (in_dim + pe_in_dim + out_pad) + w_slab.size))

    out = pl.pallas_call(
        kernel,
        out_shape=jax.ShapeDtypeStruct((N, out_pad), jnp.float32),
        grid=(K + 1, T),
        in_specs=[
            pl.BlockSpec((tile_m, in_dim), lambda s, i: (i, 0)),
            pl.BlockSpec((tile_m, pe_in_dim), lambda s, i: (i, 0)),
            pl.BlockSpec((tile_m, N), lambda s, i: (i, 0)),
            pl.BlockSpec(w_slab.shape, lambda s, i: (0, 0)),
        ],
        out_specs=pl.BlockSpec((tile_m, out_pad), lambda s, i: (i, 0)),
        scratch_shapes=[
            pltpu.VMEM((2 * N, F), jnp.float32),        # ping-pong [pe | x]
            pltpu.VMEM((N, pe_hid_dim), jnp.float32),   # raw pe (pe_0)
            pltpu.VMEM((N, out_dim), jnp.float32),      # hidden accumulator
        ],
        compiler_params=pltpu.CompilerParams(
            # The step axis is a true sequential dependency (cp @ cp.T couples
            # all rows), and the ping-pong pe/x scratch must be shared by every
            # row tile of a step, so neither axis can be megacore-"parallel".
            # TODO(synk): v7x 2-TC split needs VMEM_SHARED/CMEM + core_barrier.
            dimension_semantics=("arbitrary", "arbitrary"),
            vmem_limit_bytes=32 * 1024 * 1024,
        ),
        cost_estimate=pl.CostEstimate(flops=flops, transcendentals=trans,
                                      bytes_accessed=nbytes),
    )(x, pos_enc, A_in, w_slab)
    return out[:, pe_hid_dim:pe_hid_dim + out_dim], out[:, :pe_hid_dim]


# ----------------------------------------------------------------------------
# Glue: gcn_norm (self-loops + symmetric normalization) as a dense matrix.
# Computed ONCE per graph, off the per-call path.
# NOTE: degree computed from `col`; correct for symmetric edge_index.
# ----------------------------------------------------------------------------
def dense_gcn_norm(edge_index, num_nodes):
    row, col = edge_index[0], edge_index[1]
    loop = jnp.arange(num_nodes, dtype=row.dtype)
    row = jnp.concatenate([row, loop])
    col = jnp.concatenate([col, loop])
    w = jnp.ones(row.shape[0], dtype=jnp.float32)
    deg = jnp.zeros((num_nodes,), jnp.float32).at[col].add(w)
    dis = jnp.where(deg > 0, 1.0 / jnp.sqrt(deg), 0.0)
    norm = dis[row] * w * dis[col]
    A = jnp.zeros((num_nodes, num_nodes), jnp.float32).at[col, row].add(norm)
    return A


# ----------------------------------------------------------------------------
# Pure-JAX reference (same math, no Pallas)
# ----------------------------------------------------------------------------
def reference_forward(x, pos_enc, A, p, *, K, pe_alpha, pe_beta):
    pe = jnp.tanh(pos_enc @ p["pelin_w"] + p["pelin_b"])
    h = jax.nn.relu(x @ p["lin1_w"] + p["lin1_b"])
    x = h @ p["lin2_w"] + p["lin2_b"]
    raw_pe = pe
    lg = pe @ p["pe2c_wT"] + p["pe2c_b"]
    gamma = p["temp"][:, 0:1] * jnp.tanh(lg[:, 0:1])
    hidden = x * gamma
    for k in range(K):
        x = A @ x
        pe_tpo = A @ pe
        cp = pe @ p["cor_w"] + p["cor_b"]
        pe_adj = jax.nn.sigmoid(cp @ cp.T)
        pe_corr = pe_adj @ pe
        pe = (1.0 + pe_beta) * pe_tpo - pe_beta * pe_corr
        pe = pe_alpha * raw_pe + (1.0 - pe_alpha) * pe
        pe = jnp.tanh(pe)
        lg = pe @ p["pe2c_wT"] + p["pe2c_b"]
        gamma = p["temp"][:, k + 1:k + 2] * jnp.tanh(lg[:, k + 1:k + 2])
        hidden = hidden + gamma * x
    return hidden, pe


# ----------------------------------------------------------------------------
# Main
# ----------------------------------------------------------------------------
if __name__ == "__main__":
    in_dim, hid_dim, out_dim = 8, 32, 4
    PE_in_dim, PE_hid_dim = 8, 16
    K = 4
    alpha = 0.1              # GPR alpha ('PPR' init)
    PE_alpha, PE_beta = 0.5, 0.1
    # TODO(synk): dropout / dprate / PE_dropout are eval-mode identities here.

    key = jax.random.PRNGKey(0)
    ks = jax.random.split(key, 16)

    def winit(k, shape, fan_in):
        bound = 1.0 / np.sqrt(fan_in)
        return jax.random.uniform(k, shape, jnp.float32, -bound, bound)

    temp_np = alpha * (1.0 - alpha) ** np.arange(K + 1)
    temp_np[-1] = (1.0 - alpha) ** K

    params = {
        "lin1_w": winit(ks[4], (in_dim, hid_dim), in_dim),
        "lin1_b": winit(ks[5], (1, hid_dim), in_dim),
        "lin2_w": winit(ks[6], (hid_dim, out_dim), hid_dim),
        "lin2_b": winit(ks[7], (1, out_dim), hid_dim),
        "pelin_w": winit(ks[8], (PE_in_dim, PE_hid_dim), PE_in_dim),
        "pelin_b": winit(ks[9], (1, PE_hid_dim), PE_in_dim),
        "temp": jnp.asarray(temp_np, jnp.float32).reshape(1, K + 1),
        "pe2c_wT": winit(ks[10], (PE_hid_dim, K + 1), PE_hid_dim),
        "pe2c_b": winit(ks[11], (1, K + 1), PE_hid_dim),
        "cor_w": winit(ks[12], (PE_hid_dim, PE_hid_dim), PE_hid_dim),
        "cor_b": winit(ks[13], (1, PE_hid_dim), PE_hid_dim),
    }

    # Pack weights ONCE (off the per-call path).
    w_slab, offs = pack_dsf_gpr_params(params, K)
    dims = dict(K=K, hid_dim=hid_dim, out_dim=out_dim, pe_hid_dim=PE_hid_dim)

    def ring_graph(n):
        src = jnp.arange(n, dtype=jnp.int32)
        dst = (src + 1) % n
        return jnp.stack([jnp.concatenate([src, dst]),
                          jnp.concatenate([dst, src])], axis=0)

    # ---- 1) small graph: gridless, A fully VMEM-resident, f32 -------------
    N0 = 16
    x0 = jax.random.normal(ks[0], (N0, in_dim), jnp.float32)
    p0 = jax.random.normal(ks[1], (N0, PE_in_dim), jnp.float32)
    A0 = dense_gcn_norm(ring_graph(N0), N0)
    hid0, pe0 = dsf_gpr_i_forward(x0, p0, A0, w_slab, offs, dims,
                                  pe_alpha=PE_alpha, pe_beta=PE_beta)
    jax.block_until_ready((hid0, pe0))
    rh0, rp0 = reference_forward(x0, p0, A0, params, K=K,
                                 pe_alpha=PE_alpha, pe_beta=PE_beta)
    np.testing.assert_allclose(np.asarray(hid0), np.asarray(rh0),
                               rtol=1e-5, atol=1e-5)
    np.testing.assert_allclose(np.asarray(pe0), np.asarray(rp0),
                               rtol=1e-5, atol=1e-5)

    # ---- 2) larger graph: row-tiled grid kernel -----------------------------
    N1, TILE_M = 256, 128
    x1 = jax.random.normal(ks[2], (N1, in_dim), jnp.float32)
    p1 = jax.random.normal(ks[3], (N1, PE_in_dim), jnp.float32)
    A1 = dense_gcn_norm(ring_graph(N1), N1)
    rh1, rp1 = reference_forward(x1, p1, A1, params, K=K,
                                 pe_alpha=PE_alpha, pe_beta=PE_beta)

    # f32 MXU path
    hid1, pe1 = dsf_gpr_i_forward_tiled(x1, p1, A1, w_slab, offs, dims,
                                        pe_alpha=PE_alpha, pe_beta=PE_beta,
                                        tile_m=TILE_M, mxu_dtype=jnp.float32)
    jax.block_until_ready((hid1, pe1))
    np.testing.assert_allclose(np.asarray(hid1), np.asarray(rh1),
                               rtol=1e-3, atol=1e-3)
    np.testing.assert_allclose(np.asarray(pe1), np.asarray(rp1),
                               rtol=1e-3, atol=1e-3)

    # bf16 MXU operands / bf16 sigmoid with f32 accumulation (v6e/v7x path).
    # Tolerance loosened vs the f32 reference per the review note.
    hid2, pe2 = dsf_gpr_i_forward_tiled(x1, p1, A1, w_slab, offs, dims,
                                        pe_alpha=PE_alpha, pe_beta=PE_beta,
                                        tile_m=TILE_M, mxu_dtype=jnp.bfloat16)
    jax.block_until_ready((hid2, pe2))
    np.testing.assert_allclose(np.asarray(hid2), np.asarray(rh1),
                               rtol=0.15, atol=0.15)
    np.testing.assert_allclose(np.asarray(pe2), np.asarray(rp1),
                               rtol=0.15, atol=0.15)

    print("KERNEL_OK")
</pallas_src>

<mosaic_0001>
module attributes {stable_mosaic.version = 11 : i64} {
  func.func @_dsf_gpr_fused_kernel(%arg0: memref<16x8xf32, #tpu.memory_space<vmem>>, %arg1: memref<16x8xf32, #tpu.memory_space<vmem>>, %arg2: memref<16x16xf32, #tpu.memory_space<vmem>>, %arg3: memref<72x32xf32, #tpu.memory_space<vmem>>, %arg4: memref<16x128xf32, #tpu.memory_space<vmem>>, %arg5: memref<16x128xf32, #tpu.memory_space<vmem>>) attributes {dimension_semantics = [], scalar_prefetch = 0 : i64, scratch_operands = 1 : i64, tpu.core_type = #tpu.core_type<tc>} {
    %c0 = arith.constant 0 : index
    %c0_0 = arith.constant 0 : index
    %0 = vector.load %arg3[%c0, %c0_0] : memref<72x32xf32, #tpu.memory_space<vmem>>, vector<8x32xf32>
    %c8 = arith.constant 8 : index
    %c0_1 = arith.constant 0 : index
    %1 = vector.load %arg3[%c8, %c0_1] : memref<72x32xf32, #tpu.memory_space<vmem>>, vector<32x4xf32>
    %c40 = arith.constant 40 : index
    %c0_2 = arith.constant 0 : index
    %2 = vector.load %arg3[%c40, %c0_2] : memref<72x32xf32, #tpu.memory_space<vmem>>, vector<8x16xf32>
    %c48 = arith.constant 48 : index
    %c0_3 = arith.constant 0 : index
    %3 = vector.load %arg3[%c48, %c0_3] : memref<72x32xf32, #tpu.memory_space<vmem>>, vector<16x21xf32>
    %c64 = arith.constant 64 : index
    %c0_4 = arith.constant 0 : index
    %4 = vector.load %arg3[%c64, %c0_4] : memref<72x32xf32, #tpu.memory_space<vmem>>, vector<1x32xf32>
    %c65 = arith.constant 65 : index
    %c0_5 = arith.constant 0 : index
    %5 = vector.load %arg3[%c65, %c0_5] : memref<72x32xf32, #tpu.memory_space<vmem>>, vector<1x4xf32>
    %c66 = arith.constant 66 : index
    %c0_6 = arith.constant 0 : index
    %6 = vector.load %arg3[%c66, %c0_6] : memref<72x32xf32, #tpu.memory_space<vmem>>, vector<1x16xf32>
    %c67 = arith.constant 67 : index
    %c0_7 = arith.constant 0 : index
    %7 = vector.load %arg3[%c67, %c0_7] : memref<72x32xf32, #tpu.memory_space<vmem>>, vector<1x16xf32>
    %c68 = arith.constant 68 : index
    %c0_8 = arith.constant 0 : index
    %8 = vector.load %arg3[%c68, %c0_8] : memref<72x32xf32, #tpu.memory_space<vmem>>, vector<1x5xf32>
    %c69 = arith.constant 69 : index
    %c0_9 = arith.constant 0 : index
    %9 = vector.load %arg3[%c69, %c0_9] : memref<72x32xf32, #tpu.memory_space<vmem>>, vector<1x5xf32>
    %10 = vector.shape_cast %7 : vector<1x16xf32> to vector<1x16xf32>
    %11 = vector.broadcast %10 : vector<1x16xf32> to vector<16x16xf32>
    %c0_10 = arith.constant 0 : index
    %c0_11 = arith.constant 0 : index
    %12 = vector.load %arg2[%c0_10, %c0_11] : memref<16x16xf32, #tpu.memory_space<vmem>>, vector<16x16xf32>
    %c0_12 = arith.constant 0 : index
    %c0_13 = arith.constant 0 : index
    %13 = vector.load %arg1[%c0_12, %c0_13] : memref<16x8xf32, #tpu.memory_space<vmem>>, vector<16x8xf32>
    %cst = arith.constant dense<0.000000e+00> : vector<16x16xf32>
    %14 = tpu.matmul %13, %2, %cst {dimension_numbers = #tpu.dot_dimension_numbers<[1], [0], [0], [1], [0, 0, 1, 1], [], []>} : vector<16x8xf32>, vector<8x16xf32>, vector<16x16xf32> -> vector<16x16xf32>
    %15 = vector.shape_cast %6 : vector<1x16xf32> to vector<1x16xf32>
    %16 = vector.broadcast %15 : vector<1x16xf32> to vector<16x16xf32>
    %17 = arith.addf %14, %16 : vector<16x16xf32>
    %18 = math.tanh %17 : vector<16x16xf32>
    %c0_14 = arith.constant 0 : index
    %c0_15 = arith.constant 0 : index
    %19 = vector.load %arg0[%c0_14, %c0_15] : memref<16x8xf32, #tpu.memory_space<vmem>>, vector<16x8xf32>
    %cst_16 = arith.constant dense<0.000000e+00> : vector<16x32xf32>
    %20 = tpu.matmul %19, %0, %cst_16 {dimension_numbers = #tpu.dot_dimension_numbers<[1], [0], [0], [1], [0, 0, 1, 1], [], []>} : vector<16x8xf32>, vector<8x32xf32>, vector<16x32xf32> -> vector<16x32xf32>
    %21 = vector.shape_cast %4 : vector<1x32xf32> to vector<1x32xf32>
    %22 = vector.broadcast %21 : vector<1x32xf32> to vector<16x32xf32>
    %23 = arith.addf %20, %22 : vector<16x32xf32>
    %cst_17 = arith.constant 0.000000e+00 : f32
    %24 = vector.broadcast %cst_17 : f32 to vector<16x32xf32>
    %25 = arith.maximumf %23, %24 : vector<16x32xf32>
    %cst_18 = arith.constant dense<0.000000e+00> : vector<16x4xf32>
    %26 = tpu.matmul %25, %1, %cst_18 {dimension_numbers = #tpu.dot_dimension_numbers<[1], [0], [0], [1], [0, 0, 1, 1], [], []>} : vector<16x32xf32>, vector<32x4xf32>, vector<16x4xf32> -> vector<16x4xf32>
    %27 = vector.shape_cast %5 : vector<1x4xf32> to vector<1x4xf32>
    %28 = vector.broadcast %27 : vector<1x4xf32> to vector<16x4xf32>
    %29 = arith.addf %26, %28 : vector<16x4xf32>
    %c0_19 = arith.constant 0 : index
    %c0_20 = arith.constant 0 : index
    %30 = vector.load %arg5[%c0_19, %c0_20] : memref<16x128xf32, #tpu.memory_space<vmem>>, vector<16x16xf32>
    tpu.vector_store %arg5[%c0_19, %c0_20], %18 {strides = array<i32>} : memref<16x128xf32, #tpu.memory_space<vmem>>, vector<16x16xf32>,
    %c0_21 = arith.constant 0 : index
    %c16 = arith.constant 16 : index
    %31 = vector.load %arg5[%c0_21, %c16] : memref<16x128xf32, #tpu.memory_space<vmem>>, vector<16x4xf32>
    tpu.vector_store %arg5[%c0_21, %c16], %29 {strides = array<i32>} : memref<16x128xf32, #tpu.memory_space<vmem>>, vector<16x4xf32>,
    %cst_22 = arith.constant 0.000000e+00 : f32
    %32 = vector.broadcast %cst_22 : f32 to vector<16x108xf32>
    %c0_23 = arith.constant 0 : index
    %c20 = arith.constant 20 : index
    %33 = vector.load %arg5[%c0_23, %c20] : memref<16x128xf32, #tpu.memory_space<vmem>>, vector<16x108xf32>
    tpu.vector_store %arg5[%c0_23, %c20], %32 {strides = array<i32>} : memref<16x128xf32, #tpu.memory_space<vmem>>, vector<16x108xf32>,
    %cst_24 = arith.constant 0.000000e+00 : f32
    %34 = vector.broadcast %cst_24 : f32 to vector<16x128xf32>
    %c0_25 = arith.constant 0 : index
    %c0_26 = arith.constant 0 : index
    %35 = vector.load %arg5[%c0_25, %c0_26] : memref<16x128xf32, #tpu.memory_space<vmem>>, vector<16x128xf32>
    %cst_27 = arith.constant dense<0.000000e+00> : vector<16x21xf32>
    %36 = tpu.matmul %18, %3, %cst_27 {dimension_numbers = #tpu.dot_dimension_numbers<[1], [0], [0], [1], [0, 0, 1, 1], [], []>} : vector<16x16xf32>, vector<16x21xf32>, vector<16x21xf32> -> vector<16x21xf32>
    %37 = vector.extract_strided_slice %36 {offsets = [0, 0], sizes = [16, 16], strides = [1, 1]} : vector<16x21xf32> to vector<16x16xf32>
    %38 = arith.addf %37, %11 : vector<16x16xf32>
    %39 = vector.extract_strided_slice %36 {offsets = [0, 16], sizes = [16, 1], strides = [1, 1]} : vector<16x21xf32> to vector<16x1xf32>
    %40 = vector.extract_strided_slice %9 {offsets = [0, 0], sizes = [1, 1], strides = [1, 1]} : vector<1x5xf32> to vector<1x1xf32>
    %41 = vector.broadcast %40 : vector<1x1xf32> to vector<16x1xf32>
    %42 = arith.addf %39, %41 : vector<16x1xf32>
    %43 = vector.extract_strided_slice %8 {offsets = [0, 0], sizes = [1, 1], strides = [1, 1]} : vector<1x5xf32> to vector<1x1xf32>
    %44 = math.tanh %42 : vector<16x1xf32>
    %45 = vector.broadcast %43 : vector<1x1xf32> to vector<16x1xf32>
    %46 = arith.mulf %45, %44 : vector<16x1xf32>
    %47 = vector.broadcast %46 : vector<16x1xf32> to vector<16x128xf32>
    %48 = arith.mulf %47, %35 : vector<16x128xf32>
    %49 = arith.addf %34, %48 : vector<16x128xf32>
    %cst_28 = arith.constant dense<0.000000e+00> : vector<16x128xf32>
    %50 = tpu.matmul %12, %35, %cst_28 {dimension_numbers = #tpu.dot_dimension_numbers<[1], [0], [0], [1], [0, 0, 1, 1], [], []>} : vector<16x16xf32>, vector<16x128xf32>, vector<16x128xf32> -> vector<16x128xf32>
    %cst_29 = arith.constant dense<0.000000e+00> : vector<16x16xf32>
    %51 = tpu.matmul %38, %38, %cst_29 {dimension_numbers = #tpu.dot_dimension_numbers<[1], [1], [0], [0], [0, 0, 1, 0], [], []>} : vector<16x16xf32>, vector<16x16xf32>, vector<16x16xf32> -> vector<16x16xf32>
    %52 = arith.negf %51 : vector<16x16xf32>
    %53 = math.exp %52 : vector<16x16xf32>
    %cst_30 = arith.constant 1.000000e+00 : f32
    %54 = vector.broadcast %cst_30 : f32 to vector<16x16xf32>
    %55 = arith.addf %54, %53 : vector<16x16xf32>
    %56 = arith.divf %54, %55 : vector<16x16xf32>
    %cst_31 = arith.constant dense<0.000000e+00> : vector<16x16xf32>
    %57 = tpu.matmul %56, %18, %cst_31 {dimension_numbers = #tpu.dot_dimension_numbers<[1], [0], [0], [1], [0, 0, 1, 1], [], []>} : vector<16x16xf32>, vector<16x16xf32>, vector<16x16xf32> -> vector<16x16xf32>
    %58 = vector.extract_strided_slice %50 {offsets = [0, 0], sizes = [16, 16], strides = [1, 1]} : vector<16x128xf32> to vector<16x16xf32>
    %cst_32 = arith.constant 1.100000e+00 : f32
    %59 = vector.broadcast %cst_32 : f32 to vector<16x16xf32>
    %60 = arith.mulf %59, %58 : vector<16x16xf32>
    %cst_33 = arith.constant 1.000000e-01 : f32
    %61 = vector.broadcast %cst_33 : f32 to vector<16x16xf32>
    %62 = arith.mulf %61, %57 : vector<16x16xf32>
    %63 = arith.subf %60, %62 : vector<16x16xf32>
    %cst_34 = arith.constant 5.000000e-01 : f32
    %64 = vector.broadcast %cst_34 : f32 to vector<16x16xf32>
    %65 = arith.mulf %64, %18 : vector<16x16xf32>
    %cst_35 = arith.constant 5.000000e-01 : f32
    %66 = vector.broadcast %cst_35 : f32 to vector<16x16xf32>
    %67 = arith.mulf %66, %63 : vector<16x16xf32>
    %68 = arith.addf %65, %67 : vector<16x16xf32>
    %69 = math.tanh %68 : vector<16x16xf32>
    %c0_36 = arith.constant 0 : index
    %c0_37 = arith.constant 0 : index
    %70 = vector.load %arg5[%c0_36, %c0_37] : memref<16x128xf32, #tpu.memory_space<vmem>>, vector<16x128xf32>
    tpu.vector_store %arg5[%c0_36, %c0_37], %50 {strides = array<i32>} : memref<16x128xf32, #tpu.memory_space<vmem>>, vector<16x128xf32>,
    %c0_38 = arith.constant 0 : index
    %c0_39 = arith.constant 0 : index
    %71 = vector.load %arg5[%c0_38, %c0_39] : memref<16x128xf32, #tpu.memory_space<vmem>>, vector<16x16xf32>
    tpu.vector_store %arg5[%c0_38, %c0_39], %69 {strides = array<i32>} : memref<16x128xf32, #tpu.memory_space<vmem>>, vector<16x16xf32>,
    %c0_40 = arith.constant 0 : index
    %c0_41 = arith.constant 0 : index
    %72 = vector.load %arg5[%c0_40, %c0_41] : memref<16x128xf32, #tpu.memory_space<vmem>>, vector<16x128xf32>
    %cst_42 = arith.constant dense<0.000000e+00> : vector<16x21xf32>
    %73 = tpu.matmul %69, %3, %cst_42 {dimension_numbers = #tpu.dot_dimension_numbers<[1], [0], [0], [1], [0, 0, 1, 1], [], []>} : vector<16x16xf32>, vector<16x21xf32>, vector<16x21xf32> -> vector<16x21xf32>
    %74 = vector.extract_strided_slice %73 {offsets = [0, 0], sizes = [16, 16], strides = [1, 1]} : vector<16x21xf32> to vector<16x16xf32>
    %75 = arith.addf %74, %11 : vector<16x16xf32>
    %76 = vector.extract_strided_slice %73 {offsets = [0, 17], sizes = [16, 1], strides = [1, 1]} : vector<16x21xf32> to vector<16x1xf32>
    %77 = vector.extract_strided_slice %9 {offsets = [0, 1], sizes = [1, 1], strides = [1, 1]} : vector<1x5xf32> to vector<1x1xf32>
    %78 = vector.broadcast %77 : vector<1x1xf32> to vector<16x1xf32>
    %79 = arith.addf %76, %78 : vector<16x1xf32>
    %80 = vector.extract_strided_slice %8 {offsets = [0, 1], sizes = [1, 1], strides = [1, 1]} : vector<1x5xf32> to vector<1x1xf32>
    %81 = math.tanh %79 : vector<16x1xf32>
    %82 = vector.broadcast %80 : vector<1x1xf32> to vector<16x1xf32>
    %83 = arith.mulf %82, %81 : vector<16x1xf32>
    %84 = vector.broadcast %83 : vector<16x1xf32> to vector<16x128xf32>
    %85 = arith.mulf %84, %72 : vector<16x128xf32>
    %86 = arith.addf %49, %85 : vector<16x128xf32>
    %cst_43 = arith.constant dense<0.000000e+00> : vector<16x128xf32>
    %87 = tpu.matmul %12, %72, %cst_43 {dimension_numbers = #tpu.dot_dimension_numbers<[1], [0], [0], [1], [0, 0, 1, 1], [], []>} : vector<16x16xf32>, vector<16x128xf32>, vector<16x128xf32> -> vector<16x128xf32>
    %cst_44 = arith.constant dense<0.000000e+00> : vector<16x16xf32>
    %88 = tpu.matmul %75, %75, %cst_44 {dimension_numbers = #tpu.dot_dimension_numbers<[1], [1], [0], [0], [0, 0, 1, 0], [], []>} : vector<16x16xf32>, vector<16x16xf32>, vector<16x16xf32> -> vector<16x16xf32>
    %89 = arith.negf %88 : vector<16x16xf32>
    %90 = math.exp %89 : vector<16x16xf32>
    %cst_45 = arith.constant 1.000000e+00 : f32
    %91 = vector.broadcast %cst_45 : f32 to vector<16x16xf32>
    %92 = arith.addf %91, %90 : vector<16x16xf32>
    %93 = arith.divf %91, %92 : vector<16x16xf32>
    %cst_46 = arith.constant dense<0.000000e+00> : vector<16x16xf32>
    %94 = tpu.matmul %93, %69, %cst_46 {dimension_numbers = #tpu.dot_dimension_numbers<[1], [0], [0], [1], [0, 0, 1, 1], [], []>} : vector<16x16xf32>, vector<16x16xf32>, vector<16x16xf32> -> vector<16x16xf32>
    %95 = vector.extract_strided_slice %87 {offsets = [0, 0], sizes = [16, 16], strides = [1, 1]} : vector<16x128xf32> to vector<16x16xf32>
    %cst_47 = arith.constant 1.100000e+00 : f32
    %96 = vector.broadcast %cst_47 : f32 to vector<16x16xf32>
    %97 = arith.mulf %96, %95 : vector<16x16xf32>
    %cst_48 = arith.constant 1.000000e-01 : f32
    %98 = vector.broadcast %cst_48 : f32 to vector<16x16xf32>
    %99 = arith.mulf %98, %94 : vector<16x16xf32>
    %100 = arith.subf %97, %99 : vector<16x16xf32>
    %cst_49 = arith.constant 5.000000e-01 : f32
    %101 = vector.broadcast %cst_49 : f32 to vector<16x16xf32>
    %102 = arith.mulf %101, %18 : vector<16x16xf32>
    %cst_50 = arith.constant 5.000000e-01 : f32
    %103 = vector.broadcast %cst_50 : f32 to vector<16x16xf32>
    %104 = arith.mulf %103, %100 : vector<16x16xf32>
    %105 = arith.addf %102, %104 : vector<16x16xf32>
    %106 = math.tanh %105 : vector<16x16xf32>
    %c0_51 = arith.constant 0 : index
    %c0_52 = arith.constant 0 : index
    %107 = vector.load %arg5[%c0_51, %c0_52] : memref<16x128xf32, #tpu.memory_space<vmem>>, vector<16x128xf32>
    tpu.vector_store %arg5[%c0_51, %c0_52], %87 {strides = array<i32>} : memref<16x128xf32, #tpu.memory_space<vmem>>, vector<16x128xf32>,
    %c0_53 = arith.constant 0 : index
    %c0_54 = arith.constant 0 : index
    %108 = vector.load %arg5[%c0_53, %c0_54] : memref<16x128xf32, #tpu.memory_space<vmem>>, vector<16x16xf32>
    tpu.vector_store %arg5[%c0_53, %c0_54], %106 {strides = array<i32>} : memref<16x128xf32, #tpu.memory_space<vmem>>, vector<16x16xf32>,
    %c0_55 = arith.constant 0 : index
    %c0_56 = arith.constant 0 : index
    %109 = vector.load %arg5[%c0_55, %c0_56] : memref<16x128xf32, #tpu.memory_space<vmem>>, vector<16x128xf32>
    %cst_57 = arith.constant dense<0.000000e+00> : vector<16x21xf32>
    %110 = tpu.matmul %106, %3, %cst_57 {dimension_numbers = #tpu.dot_dimension_numbers<[1], [0], [0], [1], [0, 0, 1, 1], [], []>} : vector<16x16xf32>, vector<16x21xf32>, vector<16x21xf32> -> vector<16x21xf32>
    %111 = vector.extract_strided_slice %110 {offsets = [0, 0], sizes = [16, 16], strides = [1, 1]} : vector<16x21xf32> to vector<16x16xf32>
    %112 = arith.addf %111, %11 : vector<16x16xf32>
    %113 = vector.extract_strided_slice %110 {offsets = [0, 18], sizes = [16, 1], strides = [1, 1]} : vector<16x21xf32> to vector<16x1xf32>
    %114 = vector.extract_strided_slice %9 {offsets = [0, 2], sizes = [1, 1], strides = [1, 1]} : vector<1x5xf32> to vector<1x1xf32>
    %115 = vector.broadcast %114 : vector<1x1xf32> to vector<16x1xf32>
    %116 = arith.addf %113, %115 : vector<16x1xf32>
    %117 = vector.extract_strided_slice %8 {offsets = [0, 2], sizes = [1, 1], strides = [1, 1]} : vector<1x5xf32> to vector<1x1xf32>
    %118 = math.tanh %116 : vector<16x1xf32>
    %119 = vector.broadcast %117 : vector<1x1xf32> to vector<16x1xf32>
    %120 = arith.mulf %119, %118 : vector<16x1xf32>
    %121 = vector.broadcast %120 : vector<16x1xf32> to vector<16x128xf32>
    %122 = arith.mulf %121, %109 : vector<16x128xf32>
    %123 = arith.addf %86, %122 : vector<16x128xf32>
    %cst_58 = arith.constant dense<0.000000e+00> : vector<16x128xf32>
    %124 = tpu.matmul %12, %109, %cst_58 {dimension_numbers = #tpu.dot_dimension_numbers<[1], [0], [0], [1], [0, 0, 1, 1], [], []>} : vector<16x16xf32>, vector<16x128xf32>, vector<16x128xf32> -> vector<16x128xf32>
    %cst_59 = arith.constant dense<0.000000e+00> : vector<16x16xf32>
    %125 = tpu.matmul %112, %112, %cst_59 {dimension_numbers = #tpu.dot_dimension_numbers<[1], [1], [0], [0], [0, 0, 1, 0], [], []>} : vector<16x16xf32>, vector<16x16xf32>, vector<16x16xf32> -> vector<16x16xf32>
    %126 = arith.negf %125 : vector<16x16xf32>
    %127 = math.exp %126 : vector<16x16xf32>
    %cst_60 = arith.constant 1.000000e+00 : f32
    %128 = vector.broadcast %cst_60 : f32 to vector<16x16xf32>
    %129 = arith.addf %128, %127 : vector<16x16xf32>
    %130 = arith.divf %128, %129 : vector<16x16xf32>
    %cst_61 = arith.constant dense<0.000000e+00> : vector<16x16xf32>
    %131 = tpu.matmul %130, %106, %cst_61 {dimension_numbers = #tpu.dot_dimension_numbers<[1], [0], [0], [1], [0, 0, 1, 1], [], []>} : vector<16x16xf32>, vector<16x16xf32>, vector<16x16xf32> -> vector<16x16xf32>
    %132 = vector.extract_strided_slice %124 {offsets = [0, 0], sizes = [16, 16], strides = [1, 1]} : vector<16x128xf32> to vector<16x16xf32>
    %cst_62 = arith.constant 1.100000e+00 : f32
    %133 = vector.broadcast %cst_62 : f32 to vector<16x16xf32>
    %134 = arith.mulf %133, %132 : vector<16x16xf32>
    %cst_63 = arith.constant 1.000000e-01 : f32
    %135 = vector.broadcast %cst_63 : f32 to vector<16x16xf32>
    %136 = arith.mulf %135, %131 : vector<16x16xf32>
    %137 = arith.subf %134, %136 : vector<16x16xf32>
    %cst_64 = arith.constant 5.000000e-01 : f32
    %138 = vector.broadcast %cst_64 : f32 to vector<16x16xf32>
    %139 = arith.mulf %138, %18 : vector<16x16xf32>
    %cst_65 = arith.constant 5.000000e-01 : f32
    %140 = vector.broadcast %cst_65 : f32 to vector<16x16xf32>
    %141 = arith.mulf %140, %137 : vector<16x16xf32>
    %142 = arith.addf %139, %141 : vector<16x16xf32>
    %143 = math.tanh %142 : vector<16x16xf32>
    %c0_66 = arith.constant 0 : index
    %c0_67 = arith.constant 0 : index
    %144 = vector.load %arg5[%c0_66, %c0_67] : memref<16x128xf32, #tpu.memory_space<vmem>>, vector<16x128xf32>
    tpu.vector_store %arg5[%c0_66, %c0_67], %124 {strides = array<i32>} : memref<16x128xf32, #tpu.memory_space<vmem>>, vector<16x128xf32>,
    %c0_68 = arith.constant 0 : index
    %c0_69 = arith.constant 0 : index
    %145 = vector.load %arg5[%c0_68, %c0_69] : memref<16x128xf32, #tpu.memory_space<vmem>>, vector<16x16xf32>
    tpu.vector_store %arg5[%c0_68, %c0_69], %143 {strides = array<i32>} : memref<16x128xf32, #tpu.memory_space<vmem>>, vector<16x16xf32>,
    %c0_70 = arith.constant 0 : index
    %c0_71 = arith.constant 0 : index
    %146 = vector.load %arg5[%c0_70, %c0_71] : memref<16x128xf32, #tpu.memory_space<vmem>>, vector<16x128xf32>
    %cst_72 = arith.constant dense<0.000000e+00> : vector<16x21xf32>
    %147 = tpu.matmul %143, %3, %cst_72 {dimension_numbers = #tpu.dot_dimension_numbers<[1], [0], [0], [1], [0, 0, 1, 1], [], []>} : vector<16x16xf32>, vector<16x21xf32>, vector<16x21xf32> -> vector<16x21xf32>
    %148 = vector.extract_strided_slice %147 {offsets = [0, 0], sizes = [16, 16], strides = [1, 1]} : vector<16x21xf32> to vector<16x16xf32>
    %149 = arith.addf %148, %11 : vector<16x16xf32>
    %150 = vector.extract_strided_slice %147 {offsets = [0, 19], sizes = [16, 1], strides = [1, 1]} : vector<16x21xf32> to vector<16x1xf32>
    %151 = vector.extract_strided_slice %9 {offsets = [0, 3], sizes = [1, 1], strides = [1, 1]} : vector<1x5xf32> to vector<1x1xf32>
    %152 = vector.broadcast %151 : vector<1x1xf32> to vector<16x1xf32>
    %153 = arith.addf %150, %152 : vector<16x1xf32>
    %154 = vector.extract_strided_slice %8 {offsets = [0, 3], sizes = [1, 1], strides = [1, 1]} : vector<1x5xf32> to vector<1x1xf32>
    %155 = math.tanh %153 : vector<16x1xf32>
    %156 = vector.broadcast %154 : vector<1x1xf32> to vector<16x1xf32>
    %157 = arith.mulf %156, %155 : vector<16x1xf32>
    %158 = vector.broadcast %157 : vector<16x1xf32> to vector<16x128xf32>
    %159 = arith.mulf %158, %146 : vector<16x128xf32>
    %160 = arith.addf %123, %159 : vector<16x128xf32>
    %cst_73 = arith.constant dense<0.000000e+00> : vector<16x128xf32>
    %161 = tpu.matmul %12, %146, %cst_73 {dimension_numbers = #tpu.dot_dimension_numbers<[1], [0], [0], [1], [0, 0, 1, 1], [], []>} : vector<16x16xf32>, vector<16x128xf32>, vector<16x128xf32> -> vector<16x128xf32>
    %cst_74 = arith.constant dense<0.000000e+00> : vector<16x16xf32>
    %162 = tpu.matmul %149, %149, %cst_74 {dimension_numbers = #tpu.dot_dimension_numbers<[1], [1], [0], [0], [0, 0, 1, 0], [], []>} : vector<16x16xf32>, vector<16x16xf32>, vector<16x16xf32> -> vector<16x16xf32>
    %163 = arith.negf %162 : vector<16x16xf32>
    %164 = math.exp %163 : vector<16x16xf32>
    %cst_75 = arith.constant 1.000000e+00 : f32
    %165 = vector.broadcast %cst_75 : f32 to vector<16x16xf32>
    %166 = arith.addf %165, %164 : vector<16x16xf32>
    %167 = arith.divf %165, %166 : vector<16x16xf32>
    %cst_76 = arith.constant dense<0.000000e+00> : vector<16x16xf32>
    %168 = tpu.matmul %167, %143, %cst_76 {dimension_numbers = #tpu.dot_dimension_numbers<[1], [0], [0], [1], [0, 0, 1, 1], [], []>} : vector<16x16xf32>, vector<16x16xf32>, vector<16x16xf32> -> vector<16x16xf32>
    %169 = vector.extract_strided_slice %161 {offsets = [0, 0], sizes = [16, 16], strides = [1, 1]} : vector<16x128xf32> to vector<16x16xf32>
    %cst_77 = arith.constant 1.100000e+00 : f32
    %170 = vector.broadcast %cst_77 : f32 to vector<16x16xf32>
    %171 = arith.mulf %170, %169 : vector<16x16xf32>
    %cst_78 = arith.constant 1.000000e-01 : f32
    %172 = vector.broadcast %cst_78 : f32 to vector<16x16xf32>
    %173 = arith.mulf %172, %168 : vector<16x16xf32>
    %174 = arith.subf %171, %173 : vector<16x16xf32>
    %cst_79 = arith.constant 5.000000e-01 : f32
    %175 = vector.broadcast %cst_79 : f32 to vector<16x16xf32>
    %176 = arith.mulf %175, %18 : vector<16x16xf32>
    %cst_80 = arith.constant 5.000000e-01 : f32
    %177 = vector.broadcast %cst_80 : f32 to vector<16x16xf32>
    %178 = arith.mulf %177, %174 : vector<16x16xf32>
    %179 = arith.addf %176, %178 : vector<16x16xf32>
    %180 = math.tanh %179 : vector<16x16xf32>
    %c0_81 = arith.constant 0 : index
    %c0_82 = arith.constant 0 : index
    %181 = vector.load %arg5[%c0_81, %c0_82] : memref<16x128xf32, #tpu.memory_space<vmem>>, vector<16x128xf32>
    tpu.vector_store %arg5[%c0_81, %c0_82], %161 {strides = array<i32>} : memref<16x128xf32, #tpu.memory_space<vmem>>, vector<16x128xf32>,
    %c0_83 = arith.constant 0 : index
    %c0_84 = arith.constant 0 : index
    %182 = vector.load %arg5[%c0_83, %c0_84] : memref<16x128xf32, #tpu.memory_space<vmem>>, vector<16x16xf32>
    tpu.vector_store %arg5[%c0_83, %c0_84], %180 {strides = array<i32>} : memref<16x128xf32, #tpu.memory_space<vmem>>, vector<16x16xf32>,
    %c0_85 = arith.constant 0 : index
    %c0_86 = arith.constant 0 : index
    %183 = vector.load %arg5[%c0_85, %c0_86] : memref<16x128xf32, #tpu.memory_space<vmem>>, vector<16x128xf32>
    %184 = vector.extract_strided_slice %3 {offsets = [0, 20], sizes = [16, 1], strides = [1, 1]} : vector<16x21xf32> to vector<16x1xf32>
    %cst_87 = arith.constant dense<0.000000e+00> : vector<16x1xf32>
    %185 = tpu.matmul %180, %184, %cst_87 {dimension_numbers = #tpu.dot_dimension_numbers<[1], [0], [0], [1], [0, 0, 1, 1], [], []>} : vector<16x16xf32>, vector<16x1xf32>, vector<16x1xf32> -> vector<16x1xf32>
    %186 = vector.extract_strided_slice %9 {offsets = [0, 4], sizes = [1, 1], strides = [1, 1]} : vector<1x5xf32> to vector<1x1xf32>
    %187 = vector.broadcast %186 : vector<1x1xf32> to vector<16x1xf32>
    %188 = arith.addf %185, %187 : vector<16x1xf32>
    %189 = vector.extract_strided_slice %8 {offsets = [0, 4], sizes = [1, 1], strides = [1, 1]} : vector<1x5xf32> to vector<1x1xf32>
    %190 = math.tanh %188 : vector<16x1xf32>
    %191 = vector.broadcast %189 : vector<1x1xf32> to vector<16x1xf32>
    %192 = arith.mulf %191, %190 : vector<16x1xf32>
    %193 = vector.broadcast %192 : vector<16x1xf32> to vector<16x128xf32>
    %194 = arith.mulf %193, %183 : vector<16x128xf32>
    %195 = arith.addf %160, %194 : vector<16x128xf32>
    %c0_88 = arith.constant 0 : index
    %c0_89 = arith.constant 0 : index
    %196 = vector.load %arg4[%c0_88, %c0_89] : memref<16x128xf32, #tpu.memory_space<vmem>>, vector<16x128xf32>
    tpu.vector_store %arg4[%c0_88, %c0_89], %195 {strides = array<i32>} : memref<16x128xf32, #tpu.memory_space<vmem>>, vector<16x128xf32>,
    %c0_90 = arith.constant 0 : index
    %c0_91 = arith.constant 0 : index
    %197 = vector.load %arg4[%c0_90, %c0_91] : memref<16x128xf32, #tpu.memory_space<vmem>>, vector<16x16xf32>
    tpu.vector_store %arg4[%c0_90, %c0_91], %180 {strides = array<i32>} : memref<16x128xf32, #tpu.memory_space<vmem>>, vector<16x16xf32>,
    return
  }
}

</mosaic_0001>

<llo_original>
// kernel: tpu_custom_call.1
$region0: #{tpu_custom_call.1}
  #allocation0 [shape = 'u32[]', space=smem, size = 0x4, offset = 0x4, fixed_abs, tag = 'smem constant byte address 0x4 - core index']
  #allocation1 [shape = 'u32[144,128]{1,0:T(1,128)}', space=vmem, size = 0x12000, scoped, tag = 'internal scratch']
  #allocation2 [shape = 'f32[16,128]{1,0:T(8,128)}', space=vmem, size = 0x2000, scoped, tag = 'scratch operand']
  %s0 = inlined_call_operand.vmem [shape: f32[16,8], index: 0, kind: input, shape index: {}]
  %s1 = inlined_call_operand.vmem [shape: f32[16,8], index: 1, kind: input, shape index: {}]
  %s2 = inlined_call_operand.vmem [shape: f32[16,16], index: 2, kind: input, shape index: {}]
  %s3 = inlined_call_operand.vmem [shape: f32[72,32], index: 3, kind: input, shape index: {}]
  %s4 = inlined_call_operand.hbm [shape: f32[16,128], index: 4, kind: output, shape index: {}]
  %s5 = sld [smem:[#allocation0]]
  $region26: #{tpu_custom_call.1} parent=0
    _
  %s7 = ssub.s32 1, %s5
  %s8 = scalar_select 0, %s7, %s5
  $region1: #{tpu_custom_call.1} parent=0
    #allocation3 [shape = 'u8[8192]{0}', space=vmem, size = 0x2000, scoped, tag = 'output window, operand 0, single buffered']
    #allocation4 [shape = 's32[1]{0}', space=sflag, size = 0x4, scoped, tag = 'scoped memory for tpu_custom_call.1']
    %9 = vsyncpa [#allocation4], 0
    // Predicated region
    $region2: #{tpu_custom_call.1} parent=1 // pred_check
      _
    $region3: #{tpu_custom_call.1} parent=1 // pred_check_branch
      %11 = sbr.rel (0) target = $region5
    $region4: #{tpu_custom_call.1} parent=1 // pred_region
      _
    $region5: #{tpu_custom_call.1} parent=1 // pred_fallthru
      _
    // Predicated region
    $region6: #{tpu_custom_call.1} parent=1 // pred_check
      _
    $region7: #{tpu_custom_call.1} parent=1 // pred_check_branch
      %13 = sbr.rel (0) target = $region9
    $region8: #{tpu_custom_call.1} parent=1 // pred_region
      _
    $region9: #{tpu_custom_call.1} parent=1 // pred_fallthru
      _
    // Predicated region
    $region10: #{tpu_custom_call.1} parent=1 // pred_check
      _
    $region11: #{tpu_custom_call.1} parent=1 // pred_check_branch
      %15 = sbr.rel (0) target = $region13
    $region12: #{tpu_custom_call.1} parent=1 // pred_region
      _
    $region13: #{tpu_custom_call.1} parent=1 // pred_fallthru
      _
    // Predicated region
    $region14: #{tpu_custom_call.1} parent=1 // pred_check
      _
    $region15: #{tpu_custom_call.1} parent=1 // pred_check_branch
      %17 = sbr.rel (0) target = $region17
    $region16: #{tpu_custom_call.1} parent=1 // pred_region
      _
    $region17: #{tpu_custom_call.1} parent=1 // pred_fallthru
      _
    %v18 = vld [vmem:[%s3] sm:$0xff]
    %v19 = vld [vmem:[%s3 + $0x8] sm:$0xff]
    %v20 = vld [vmem:[%s3 + $0x10] sm:$0xff]
    %v21 = vld [vmem:[%s3 + $0x18] sm:$0xff]
    %v22 = vld [vmem:[%s3 + $0x20] sm:$0xff]
    %v23 = vld [vmem:[%s3 + $0x28] sm:$0xff]
    %v24 = vld [vmem:[%s3 + $0x30] sm:$0xff]
    %v25 = vld [vmem:[%s3 + $0x38] sm:$0xff]
    %v26 = vld [vmem:[%s3 + $0x40] sm:$0x1]
    %v27 = vld [vmem:[%s3 + $0x41] sm:$0x1]
    %v28 = vld [vmem:[%s3 + $0x42] sm:$0x1]
    %v29 = vld [vmem:[%s3 + $0x43] sm:$0x1]
    %v30 = vld [vmem:[%s3 + $0x44] sm:$0x1]
    %v31 = vld [vmem:[%s3 + $0x45] sm:$0x1]
    %v32 = vlaneseq
    %v33 = vshrl.u32 %v32, 7
    %v34 = vsub.s32 0, %v33
    %v35 = vrot.slane %v29, %v34
    %v36 = vld [vmem:[%s2] sm:$0xff]
    %v37 = vld [vmem:[%s2 + $0x8] sm:$0xff]
    %v38 = vld [vmem:[%s1] sm:$0xff]
    %v39 = vld [vmem:[%s1 + $0x8] sm:$0xff]
    %v40 = vlaneseq
    %v41 = vshrl.u32 %v40, 7
    %v42 = vsub.s32 0, %v41
    %v43 = vrot.slane %v28, %v42
    %vm44 = vcmask 64512
    %v46 = vsel %vm44, %v38, 0
    %v49 = vsel %vm44, %v39, 0
    %51 = vmatprep.subr.mxu0 0.0
    %52 = vmatpush1.msra.mxu0 %v23
    %53 = vmatprep.subr.mxu0 0.0
    %54 = vmatpush1.msra.mxu0 0.0
    %55 = vmatprep.subr.mxu0 0.0
    %56 = vmatpush1.msra.mxu0 0.0
    %57 = vmatprep.subr.mxu0 0.0
    %58 = vmatpush1.msra.mxu0 0.0
    %59 = vmatprep.subr.mxu0 0.0
    %60 = vmatpush1.msra.mxu0 0.0
    %61 = vmatprep.subr.mxu0 0.0
    %62 = vmatpush1.msra.mxu0 0.0
    %63 = vmatprep.subr.mxu0 0.0
    %64 = vmatpush1.msra.mxu0 0.0
    %65 = vmatprep.subr.mxu0 0.0
    %66 = vmatpush1.msra.mxu0 0.0
    %67 = vmatprep.subr.mxu0 0.0
    %68 = vmatpush1.msra.mxu0 0.0
    %69 = vmatprep.subr.mxu0 0.0
    %70 = vmatpush1.msra.mxu0 0.0
    %71 = vmatprep.subr.mxu0 0.0
    %72 = vmatpush1.msra.mxu0 0.0
    %73 = vmatprep.subr.mxu0 0.0
    %74 = vmatpush1.msra.mxu0 0.0
    %75 = vmatprep.subr.mxu0 0.0
    %76 = vmatpush1.msra.mxu0 0.0
    %77 = vmatprep.subr.mxu0 0.0
    %78 = vmatpush1.msra.mxu0 0.0
    %79 = vmatprep.subr.mxu0 0.0
    %80 = vmatpush1.msra.mxu0 0.0
    %81 = vmatprep.subr.mxu0 0.0
    %82 = vmatpush1.msra.mxu0 0.0
    %83 = vmatprep.subr.mxu0 0.0
    %84 = vmatpush1.msra.mxu0 0.0
    %85 = vmatprep.subr.mxu0 0.0
    %86 = vmatpush1.msra.mxu0 0.0
    %87 = vmatprep.subr.mxu0 0.0
    %88 = vmatpush1.msra.mxu0 0.0
    %89 = vmatprep.subr.mxu0 0.0
    %90 = vmatpush1.msra.mxu0 0.0
    %91 = vmatprep.subr.mxu0 0.0
    %92 = vmatpush1.msra.mxu0 0.0
    %93 = vmatprep.subr.mxu0 0.0
    %94 = vmatpush1.msra.mxu0 0.0
    %95 = vmatprep.subr.mxu0 0.0
    %96 = vmatpush1.msra.mxu0 0.0
    %97 = vmatprep.subr.mxu0 0.0
    %98 = vmatpush1.msra.mxu0 0.0
    %99 = vmatprep.subr.mxu0 0.0
    %100 = vmatpush1.msra.mxu0 0.0
    %101 = vmatprep.subr.mxu0 0.0
    %102 = vmatpush1.msra.mxu0 0.0
    %103 = vmatprep.subr.mxu0 0.0
    %104 = vmatpush1.msra.mxu0 0.0
    %105 = vmatprep.subr.mxu0 0.0
    %106 = vmatpush1.msra.mxu0 0.0
    %107 = vmatprep.subr.mxu0 0.0
    %108 = vmatpush1.msra.mxu0 0.0
    %109 = vmatprep.subr.mxu0 0.0
    %110 = vmatpush1.msra.mxu0 0.0
    %111 = vmatprep.subr.mxu0 0.0
    %112 = vmatpush1.msra.mxu0 0.0
    %113 = vmatprep.subr.mxu0 0.0
    %114 = vmatpush1.msra.mxu0 0.0
    %115 = vmatprep.mubr.f32.mxu0 0.0
    %116 = vmatmul.mubr.f32.gmra.mrb[0].mxu0 %v46
    %v117 = vpop.f32.mrb[0].mxu0
    %v118 = vadd.f32 %v43, %v117
    %v119 = vpop.f32.mrb[0].mxu0
    %120 = vmatprep.mubr.f32.mxu0 0.0
    %121 = vmatmul.mubr.f32.gmra.mrb[0].mxu0 %v49
    %v122 = vpop.f32.mrb[0].mxu0
    %v123 = vadd.f32 %v43, %v122
    %v124 = vpop.f32.mrb[0].mxu0
    %125 = vdwg.mxu0
    %v126 = vtanh.pop %v118
    %v127 = vtanh.pop %v123
    %v128 = vld [vmem:[%s0] sm:$0xff]
    %v129 = vld [vmem:[%s0 + $0x8] sm:$0xff]
    %v130 = vlaneseq
    %v131 = vshrl.u32 %v130, 7
    %v132 = vsub.s32 0, %v131
    %v133 = vrot.slane %v26, %v132
    %v135 = vsel %vm44, %v128, 0
    %v138 = vsel %vm44, %v129, 0
    %140 = vmatprep.subr.mxu0 0.0
    %141 = vmatpush1.msra.mxu0 %v18
    %142 = vmatprep.subr.mxu0 0.0
    %143 = vmatpush1.msra.mxu0 0.0
    %144 = vmatprep.subr.mxu0 0.0
    %145 = vmatpush1.msra.mxu0 0.0
    %146 = vmatprep.subr.mxu0 0.0
    %147 = vmatpush1.msra.mxu0 0.0
    %148 = vmatprep.subr.mxu0 0.0
    %149 = vmatpush1.msra.mxu0 0.0
    %150 = vmatprep.subr.mxu0 0.0
    %151 = vmatpush1.msra.mxu0 0.0
    %152 = vmatprep.subr.mxu0 0.0
    %153 = vmatpush1.msra.mxu0 0.0
    %154 = vmatprep.subr.mxu0 0.0
    %155 = vmatpush1.msra.mxu0 0.0
    %156 = vmatprep.subr.mxu0 0.0
    %157 = vmatpush1.msra.mxu0 0.0
    %158 = vmatprep.subr.mxu0 0.0
    %159 = vmatpush1.msra.mxu0 0.0
    %160 = vmatprep.subr.mxu0 0.0
    %161 = vmatpush1.msra.mxu0 0.0
    %162 = vmatprep.subr.mxu0 0.0
    %163 = vmatpush1.msra.mxu0 0.0
    %164 = vmatprep.subr.mxu0 0.0
    %165 = vmatpush1.msra.mxu0 0.0
    %166 = vmatprep.subr.mxu0 0.0
    %167 = vmatpush1.msra.mxu0 0.0
    %168 = vmatprep.subr.mxu0 0.0
    %169 = vmatpush1.msra.mxu0 0.0
    %170 = vmatprep.subr.mxu0 0.0
    %171 = vmatpush1.msra.mxu0 0.0
    %172 = vmatprep.subr.mxu0 0.0
    %173 = vmatpush1.msra.mxu0 0.0
    %174 = vmatprep.subr.mxu0 0.0
    %175 = vmatpush1.msra.mxu0 0.0
    %176 = vmatprep.subr.mxu0 0.0
    %177 = vmatpush1.msra.mxu0 0.0
    %178 = vmatprep.subr.mxu0 0.0
    %179 = vmatpush1.msra.mxu0 0.0
    %180 = vmatprep.subr.mxu0 0.0
    %181 = vmatpush1.msra.mxu0 0.0
    %182 = vmatprep.subr.mxu0 0.0
    %183 = vmatpush1.msra.mxu0 0.0
    %184 = vmatprep.subr.mxu0 0.0
    %185 = vmatpush1.msra.mxu0 0.0
    %186 = vmatprep.subr.mxu0 0.0
    %187 = vmatpush1.msra.mxu0 0.0
    %188 = vmatprep.subr.mxu0 0.0
    %189 = vmatpush1.msra.mxu0 0.0
    %190 = vmatprep.subr.mxu0 0.0
    %191 = vmatpush1.msra.mxu0 0.0
    %192 = vmatprep.subr.mxu0 0.0
    %193 = vmatpush1.msra.mxu0 0.0
    %194 = vmatprep.subr.mxu0 0.0
    %195 = vmatpush1.msra.mxu0 0.0
    %196 = vmatprep.subr.mxu0 0.0
    %197 = vmatpush1.msra.mxu0 0.0
    %198 = vmatprep.subr.mxu0 0.0
    %199 = vmatpush1.msra.mxu0 0.0
    %200 = vmatprep.subr.mxu0 0.0
    %201 = vmatpush1.msra.mxu0 0.0
    %202 = vmatprep.subr.mxu0 0.0
    %203 = vmatpush1.msra.mxu0 0.0
    %204 = vmatprep.mubr.f32.mxu0 0.0
    %205 = vmatmul.mubr.f32.gmra.mrb[0].mxu0 %v135
    %v206 = vpop.f32.mrb[0].mxu0
    %v207 = vadd.f32 %v133, %v206
    %v208 = vpop.f32.mrb[0].mxu0
    %209 = vmatprep.mubr.f32.mxu0 0.0
    %210 = vmatmul.mubr.f32.gmra.mrb[0].mxu0 %v138
    %v211 = vpop.f32.mrb[0].mxu0
    %v212 = vadd.f32 %v133, %v211
    %v213 = vpop.f32.mrb[0].mxu0
    %214 = vdwg.mxu0
    %v215 = vmax.f32 %v207, 0.0
    %v216 = vmax.f32 %v212, 0.0
    %v217 = vlaneseq
    %v218 = vshrl.u32 %v217, 7
    %v219 = vsub.s32 0, %v218
    %v220 = vrot.slane %v27, %v219
    %vm221 = vcmask 261120
    %v223 = vsel %vm221, %v215, 0
    %v226 = vsel %vm221, %v216, 0
    %228 = vmatprep.subr.mxu0 0.0
    %229 = vmatpush1.msra.mxu0 %v19
    %230 = vmatprep.subr.mxu0 0.0
    %231 = vmatpush1.msra.mxu0 %v20
    %232 = vmatprep.subr.mxu0 0.0
    %233 = vmatpush1.msra.mxu0 %v21
    %234 = vmatprep.subr.mxu0 0.0
    %235 = vmatpush1.msra.mxu0 %v22
    %236 = vmatprep.subr.mxu0 0.0
    %237 = vmatpush1.msra.mxu0 0.0
    %238 = vmatprep.subr.mxu0 0.0
    %239 = vmatpush1.msra.mxu0 0.0
    %240 = vmatprep.subr.mxu0 0.0
    %241 = vmatpush1.msra.mxu0 0.0
    %242 = vmatprep.subr.mxu0 0.0
    %243 = vmatpush1.msra.mxu0 0.0
    %244 = vmatprep.subr.mxu0 0.0
    %245 = vmatpush1.msra.mxu0 0.0
    %246 = vmatprep.subr.mxu0 0.0
    %247 = vmatpush1.msra.mxu0 0.0
    %248 = vmatprep.subr.mxu0 0.0
    %249 = vmatpush1.msra.mxu0 0.0
    %250 = vmatprep.subr.mxu0 0.0
    %251 = vmatpush1.msra.mxu0 0.0
    %252 = vmatprep.subr.mxu0 0.0
    %253 = vmatpush1.msra.mxu0 0.0
    %254 = vmatprep.subr.mxu0 0.0
    %255 = vmatpush1.msra.mxu0 0.0
    %256 = vmatprep.subr.mxu0 0.0
    %257 = vmatpush1.msra.mxu0 0.0
    %258 = vmatprep.subr.mxu0 0.0
    %259 = vmatpush1.msra.mxu0 0.0
    %260 = vmatprep.subr.mxu0 0.0
    %261 = vmatpush1.msra.mxu0 0.0
    %262 = vmatprep.subr.mxu0 0.0
    %263 = vmatpush1.msra.mxu0 0.0
    %264 = vmatprep.subr.mxu0 0.0
    %265 = vmatpush1.msra.mxu0 0.0
    %266 = vmatprep.subr.mxu0 0.0
    %267 = vmatpush1.msra.mxu0 0.0
    %268 = vmatprep.subr.mxu0 0.0
    %269 = vmatpush1.msra.mxu0 0.0
    %270 = vmatprep.subr.mxu0 0.0
    %271 = vmatpush1.msra.mxu0 0.0
    %272 = vmatprep.subr.mxu0 0.0
    %273 = vmatpush1.msra.mxu0 0.0
    %274 = vmatprep.subr.mxu0 0.0
    %275 = vmatpush1.msra.mxu0 0.0
    %276 = vmatprep.subr.mxu0 0.0
    %277 = vmatpush1.msra.mxu0 0.0
    %278 = vmatprep.subr.mxu0 0.0
    %279 = vmatpush1.msra.mxu0 0.0
    %280 = vmatprep.subr.mxu0 0.0
    %281 = vmatpush1.msra.mxu0 0.0
    %282 = vmatprep.subr.mxu0 0.0
    %283 = vmatpush1.msra.mxu0 0.0
    %284 = vmatprep.subr.mxu0 0.0
    %285 = vmatpush1.msra.mxu0 0.0
    %286 = vmatprep.subr.mxu0 0.0
    %287 = vmatpush1.msra.mxu0 0.0
    %288 = vmatprep.subr.mxu0 0.0
    %289 = vmatpush1.msra.mxu0 0.0
    %290 = vmatprep.subr.mxu0 0.0
    %291 = vmatpush1.msra.mxu0 0.0
    %292 = vmatprep.mubr.f32.mxu0 0.0
    %293 = vmatmul.mubr.f32.gmra.mrb[0].mxu0 %v223
    %v294 = vpop.f32.mrb[0].mxu0
    %v295 = vadd.f32 %v220, %v294
    %v296 = vpop.f32.mrb[0].mxu0
    %297 = vmatprep.mubr.f32.mxu0 0.0
    %298 = vmatmul.mubr.f32.gmra.mrb[0].mxu0 %v226
    %v299 = vpop.f32.mrb[0].mxu0
    %v300 = vadd.f32 %v220, %v299
    %v301 = vpop.f32.mrb[0].mxu0
    %302 = vdwg.mxu0
    %vm303 = vcmask 130048
    %304 = vst.msk [vmem:[#allocation2] sm:$0xff] %vm303, %v126
    %305 = vst.msk [vmem:[#allocation2 + $0x8] sm:$0xff] %vm303, %v127
    %308 = vrot.lane.b32.xlu0 %v295, 16
    %v309 = vpop.permute.xlu0 %308
    %310 = vrot.lane.b32.xlu0 %v300, 16
    %v311 = vpop.permute.xlu0 %310
    %vm314 = vcmask 162944
    %315 = vst.msk [vmem:[#allocation2] sm:$0xff] %vm314, %v309
    %316 = vst.msk [vmem:[#allocation2 + $0x8] sm:$0xff] %vm314, %v311
    %vm317 = vcmask 1047712
    %318 = vst.msk [vmem:[#allocation2] sm:$0xff] %vm317, 0.0
    %319 = vst.msk [vmem:[#allocation2 + $0x8] sm:$0xff] %vm317, 0.0
    %v320 = vld [vmem:[#allocation2] sm:$0xff]
    %v321 = vld [vmem:[#allocation2 + $0x8] sm:$0xff]
    %v323 = vsel %vm303, %v126, 0
    %v326 = vsel %vm303, %v127, 0
    %328 = vmatprep.subr.mxu0 0.0
    %329 = vmatpush1.msra.mxu0 %v24
    %330 = vmatprep.subr.mxu0 0.0
    %331 = vmatpush1.msra.mxu0 %v25
    %332 = vmatprep.subr.mxu0 0.0
    %333 = vmatpush1.msra.mxu0 0.0
    %334 = vmatprep.subr.mxu0 0.0
    %335 = vmatpush1.msra.mxu0 0.0
    %336 = vmatprep.subr.mxu0 0.0
    %337 = vmatpush1.msra.mxu0 0.0
    %338 = vmatprep.subr.mxu0 0.0
    %339 = vmatpush1.msra.mxu0 0.0
    %340 = vmatprep.subr.mxu0 0.0
    %341 = vmatpush1.msra.mxu0 0.0
    %342 = vmatprep.subr.mxu0 0.0
    %343 = vmatpush1.msra.mxu0 0.0
    %344 = vmatprep.subr.mxu0 0.0
    %345 = vmatpush1.msra.mxu0 0.0
    %346 = vmatprep.subr.mxu0 0.0
    %347 = vmatpush1.msra.mxu0 0.0
    %348 = vmatprep.subr.mxu0 0.0
    %349 = vmatpush1.msra.mxu0 0.0
    %350 = vmatprep.subr.mxu0 0.0
    %351 = vmatpush1.msra.mxu0 0.0
    %352 = vmatprep.subr.mxu0 0.0
    %353 = vmatpush1.msra.mxu0 0.0
    %354 = vmatprep.subr.mxu0 0.0
    %355 = vmatpush1.msra.mxu0 0.0
    %356 = vmatprep.subr.mxu0 0.0
    %357 = vmatpush1.msra.mxu0 0.0
    %358 = vmatprep.subr.mxu0 0.0
    %359 = vmatpush1.msra.mxu0 0.0
    %360 = vmatprep.subr.mxu0 0.0
    %361 = vmatpush1.msra.mxu0 0.0
    %362 = vmatprep.subr.mxu0 0.0
    %363 = vmatpush1.msra.mxu0 0.0
    %364 = vmatprep.subr.mxu0 0.0
    %365 = vmatpush1.msra.mxu0 0.0
    %366 = vmatprep.subr.mxu0 0.0
    %367 = vmatpush1.msra.mxu0 0.0
    %368 = vmatprep.subr.mxu0 0.0
    %369 = vmatpush1.msra.mxu0 0.0
    %370 = vmatprep.subr.mxu0 0.0
    %371 = vmatpush1.msra.mxu0 0.0
    %372 = vmatprep.subr.mxu0 0.0
    %373 = vmatpush1.msra.mxu0 0.0
    %374 = vmatprep.subr.mxu0 0.0
    %375 = vmatpush1.msra.mxu0 0.0
    %376 = vmatprep.subr.mxu0 0.0
    %377 = vmatpush1.msra.mxu0 0.0
    %378 = vmatprep.subr.mxu0 0.0
    %379 = vmatpush1.msra.mxu0 0.0
    %380 = vmatprep.subr.mxu0 0.0
    %381 = vmatpush1.msra.mxu0 0.0
    %382 = vmatprep.subr.mxu0 0.0
    %383 = vmatpush1.msra.mxu0 0.0
    %384 = vmatprep.subr.mxu0 0.0
    %385 = vmatpush1.msra.mxu0 0.0
    %386 = vmatprep.subr.mxu0 0.0
    %387 = vmatpush1.msra.mxu0 0.0
    %388 = vmatprep.subr.mxu0 0.0
    %389 = vmatpush1.msra.mxu0 0.0
    %390 = vmatprep.subr.mxu0 0.0
    %391 = vmatpush1.msra.mxu0 0.0
    %392 = vmatprep.mubr.f32.mxu0 0.0
    %393 = vmatmul.mubr.f32.gmra.mrb[0].mxu0 %v323
    %v394 = vpop.f32.mrb[0].mxu0
    %v395 = vadd.f32 0.0, %v394
    %v396 = vpop.f32.mrb[0].mxu0
    %397 = vmatprep.mubr.f32.mxu0 0.0
    %398 = vmatmul.mubr.f32.gmra.mrb[0].mxu0 %v326
    %v399 = vpop.f32.mrb[0].mxu0
    %v400 = vadd.f32 0.0, %v399
    %v401 = vpop.f32.mrb[0].mxu0
    %402 = vdwg.mxu0
    %v403 = vadd.f32 %v395, %v35
    %v404 = vadd.f32 %v400, %v35
    %v405 = vlaneseq
    %v406 = vshrl.u32 %v405, 7
    %v407 = vsub.s32 0, %v406
    %v408 = vrot.slane %v31, %v407
    %410 = vrot.lane.b32.xlu0 %v408, 16
    %v411 = vpop.permute.xlu0 %410
    %v413 = vadd.f32 %v395, %v411
    %v414 = vadd.f32 %v400, %v411
    %v415 = vtanh.pop %v413
    %v416 = vtanh.pop %v414
    %v417 = vlaneseq
    %v418 = vshrl.u32 %v417, 7
    %v419 = vsub.s32 0, %v418
    %v420 = vrot.slane %v30, %v419
    %423 = vrot.lane.b32.xlu0 %v415, 112
    %v424 = vpop.permute.xlu0 %423
    %425 = vrot.lane.b32.xlu0 %v416, 112
    %v426 = vpop.permute.xlu0 %425
    %v429 = vmul.f32 %v420, %v424
    %v430 = vmul.f32 %v420, %v426
    %432 = vset.pattern.permute.xlu0 0
    %433 = vperm.xlu0 %432, %v429
    %v434 = vpop.permute.xlu0 %433
    %437 = vset.pattern.permute.xlu0 0
    %438 = vperm.xlu0 %437, %v430
    %v439 = vpop.permute.xlu0 %438
    %v441 = vmul.f32 %v434, %v320
    %v442 = vmul.f32 %v439, %v321
    %v443 = vadd.f32 %v441, 0.0
    %v444 = vadd.f32 %v442, 0.0
    %v446 = vsel %vm303, %v36, 0
    %v449 = vsel %vm303, %v37, 0
    %451 = vmatprep.subr.mxu0 0.0
    %452 = vmatpush1.msra.mxu0 %v320
    %453 = vmatprep.subr.mxu0 0.0
    %454 = vmatpush1.msra.mxu0 %v321
    %455 = vmatprep.subr.mxu0 0.0
    %456 = vmatpush1.msra.mxu0 0.0
    %457 = vmatprep.subr.mxu0 0.0
    %458 = vmatpush1.msra.mxu0 0.0
    %459 = vmatprep.subr.mxu0 0.0
    %460 = vmatpush1.msra.mxu0 0.0
    %461 = vmatprep.subr.mxu0 0.0
    %462 = vmatpush1.msra.mxu0 0.0
    %463 = vmatprep.subr.mxu0 0.0
    %464 = vmatpush1.msra.mxu0 0.0
    %465 = vmatprep.subr.mxu0 0.0
    %466 = vmatpush1.msra.mxu0 0.0
    %467 = vmatprep.subr.mxu0 0.0
    %468 = vmatpush1.msra.mxu0 0.0
    %469 = vmatprep.subr.mxu0 0.0
    %470 = vmatpush1.msra.mxu0 0.0
    %471 = vmatprep.subr.mxu0 0.0
    %472 = vmatpush1.msra.mxu0 0.0
    %473 = vmatprep.subr.mxu0 0.0
    %474 = vmatpush1.msra.mxu0 0.0
    %475 = vmatprep.subr.mxu0 0.0
    %476 = vmatpush1.msra.mxu0 0.0
    %477 = vmatprep.subr.mxu0 0.0
    %478 = vmatpush1.msra.mxu0 0.0
    %479 = vmatprep.subr.mxu0 0.0
    %480 = vmatpush1.msra.mxu0 0.0
    %481 = vmatprep.subr.mxu0 0.0
    %482 = vmatpush1.msra.mxu0 0.0
    %483 = vmatprep.subr.mxu0 0.0
    %484 = vmatpush1.msra.mxu0 0.0
    %485 = vmatprep.subr.mxu0 0.0
    %486 = vmatpush1.msra.mxu0 0.0
    %487 = vmatprep.subr.mxu0 0.0
    %488 = vmatpush1.msra.mxu0 0.0
    %489 = vmatprep.subr.mxu0 0.0
    %490 = vmatpush1.msra.mxu0 0.0
    %491 = vmatprep.subr.mxu0 0.0
    %492 = vmatpush1.msra.mxu0 0.0
    %493 = vmatprep.subr.mxu0 0.0
    %494 = vmatpush1.msra.mxu0 0.0
    %495 = vmatprep.subr.mxu0 0.0
    %496 = vmatpush1.msra.mxu0 0.0
    %497 = vmatprep.subr.mxu0 0.0
    %498 = vmatpush1.msra.mxu0 0.0
    %499 = vmatprep.subr.mxu0 0.0
    %500 = vmatpush1.msra.mxu0 0.0
    %501 = vmatprep.subr.mxu0 0.0
    %502 = vmatpush1.msra.mxu0 0.0
    %503 = vmatprep.subr.mxu0 0.0
    %504 = vmatpush1.msra.mxu0 0.0
    %505 = vmatprep.subr.mxu0 0.0
    %506 = vmatpush1.msra.mxu0 0.0
    %507 = vmatprep.subr.mxu0 0.0
    %508 = vmatpush1.msra.mxu0 0.0
    %509 = vmatprep.subr.mxu0 0.0
    %510 = vmatpush1.msra.mxu0 0.0
    %511 = vmatprep.subr.mxu0 0.0
    %512 = vmatpush1.msra.mxu0 0.0
    %513 = vmatprep.subr.mxu0 0.0
    %514 = vmatpush1.msra.mxu0 0.0
    %515 = vmatprep.mubr.f32.mxu0 0.0
    %516 = vmatmul.mubr.f32.gmra.mrb[0].mxu0 %v446
    %v517 = vpop.f32.mrb[0].mxu0
    %v518 = vadd.f32 0.0, %v517
    %v519 = vpop.f32.mrb[0].mxu0
    %520 = vmatprep.mubr.f32.mxu0 0.0
    %521 = vmatmul.mubr.f32.gmra.mrb[0].mxu0 %v449
    %v522 = vpop.f32.mrb[0].mxu0
    %v523 = vadd.f32 0.0, %v522
    %v524 = vpop.f32.mrb[0].mxu0
    %525 = vdwg.mxu0
    %v527 = vsel %vm303, %v403, 0
    %v530 = vsel %vm303, %v404, 0
    %532 = vmatprep.subr.mxu0 0.0
    %533 = vmatpush1.xpose.msra.mxu0 %v527
    %534 = vmatprep.subr.mxu0 0.0
    %535 = vmatpush1.xpose.msra.mxu0 %v530
    %536 = vmatprep.subr.mxu0 0.0
    %537 = vmatpush1.xpose.msra.mxu0 0.0
    %538 = vmatprep.subr.mxu0 0.0
    %539 = vmatpush1.xpose.msra.mxu0 0.0
    %540 = vmatprep.subr.mxu0 0.0
    %541 = vmatpush1.xpose.msra.mxu0 0.0
    %542 = vmatprep.subr.mxu0 0.0
    %543 = vmatpush1.xpose.msra.mxu0 0.0
    %544 = vmatprep.subr.mxu0 0.0
    %545 = vmatpush1.xpose.msra.mxu0 0.0
    %546 = vmatprep.subr.mxu0 0.0
    %547 = vmatpush1.xpose.msra.mxu0 0.0
    %548 = vmatprep.subr.mxu0 0.0
    %549 = vmatpush1.xpose.msra.mxu0 0.0
    %550 = vmatprep.subr.mxu0 0.0
    %551 = vmatpush1.xpose.msra.mxu0 0.0
    %552 = vmatprep.subr.mxu0 0.0
    %553 = vmatpush1.xpose.msra.mxu0 0.0
    %554 = vmatprep.subr.mxu0 0.0
    %555 = vmatpush1.xpose.msra.mxu0 0.0
    %556 = vmatprep.subr.mxu0 0.0
    %557 = vmatpush1.xpose.msra.mxu0 0.0
    %558 = vmatprep.subr.mxu0 0.0
    %559 = vmatpush1.xpose.msra.mxu0 0.0
    %560 = vmatprep.subr.mxu0 0.0
    %561 = vmatpush1.xpose.msra.mxu0 0.0
    %562 = vmatprep.subr.mxu0 0.0
    %563 = vmatpush1.xpose.msra.mxu0 0.0
    %564 = vmatprep.subr.mxu0 0.0
    %565 = vmatpush1.xpose.msra.mxu0 0.0
    %566 = vmatprep.subr.mxu0 0.0
    %567 = vmatpush1.xpose.msra.mxu0 0.0
    %568 = vmatprep.subr.mxu0 0.0
    %569 = vmatpush1.xpose.msra.mxu0 0.0
    %570 = vmatprep.subr.mxu0 0.0
    %571 = vmatpush1.xpose.msra.mxu0 0.0
    %572 = vmatprep.subr.mxu0 0.0
    %573 = vmatpush1.xpose.msra.mxu0 0.0
    %574 = vmatprep.subr.mxu0 0.0
    %575 = vmatpush1.xpose.msra.mxu0 0.0
    %576 = vmatprep.subr.mxu0 0.0
    %577 = vmatpush1.xpose.msra.mxu0 0.0
    %578 = vmatprep.subr.mxu0 0.0
    %579 = vmatpush1.xpose.msra.mxu0 0.0
    %580 = vmatprep.subr.mxu0 0.0
    %581 = vmatpush1.xpose.msra.mxu0 0.0
    %582 = vmatprep.subr.mxu0 0.0
    %583 = vmatpush1.xpose.msra.mxu0 0.0
    %584 = vmatprep.subr.mxu0 0.0
    %585 = vmatpush1.xpose.msra.mxu0 0.0
    %586 = vmatprep.subr.mxu0 0.0
    %587 = vmatpush1.xpose.msra.mxu0 0.0
    %588 = vmatprep.subr.mxu0 0.0
    %589 = vmatpush1.xpose.msra.mxu0 0.0
    %590 = vmatprep.subr.mxu0 0.0
    %591 = vmatpush1.xpose.msra.mxu0 0.0
    %592 = vmatprep.subr.mxu0 0.0
    %593 = vmatpush1.xpose.msra.mxu0 0.0
    %594 = vmatprep.subr.mxu0 0.0
    %595 = vmatpush1.xpose.msra.mxu0 0.0
    %596 = vmatprep.mubr.f32.mxu0 0.0
    %597 = vmatmul.mubr.f32.gmra.mrb[0].mxu0 %v527
    %v598 = vpop.f32.mrb[0].mxu0
    %v599 = vadd.f32 0.0, %v598
    %v600 = vpop.f32.mrb[0].mxu0
    %601 = vmatprep.mubr.f32.mxu0 0.0
    %602 = vmatmul.mubr.f32.gmra.mrb[0].mxu0 %v530
    %v603 = vpop.f32.mrb[0].mxu0
    %v604 = vadd.f32 0.0, %v603
    %v605 = vpop.f32.mrb[0].mxu0
    %606 = vdwg.mxu0
    %v607 = vxor.u32 %v599, 2147483648
    %v608 = vxor.u32 %v604, 2147483648
    %v609 = vmul.f32 %v607, 1.442695
    %v610 = vpow.pop %v609
    %v611 = vmul.f32 %v608, 1.442695
    %v612 = vpow.pop %v611
    %v613 = vadd.f32 %v610, 1.0
    %v614 = vadd.f32 %v612, 1.0
    %v615 = vrcp.pop %v613
    %v616 = vmul.f32 1.0, %v615
    %v617 = vrcp.pop %v614
    %v618 = vmul.f32 1.0, %v617
    %v620 = vsel %vm303, %v616, 0
    %v623 = vsel %vm303, %v618, 0
    %625 = vmatprep.subr.mxu0 0.0
    %626 = vmatpush1.msra.mxu0 %v126
    %627 = vmatprep.subr.mxu0 0.0
    %628 = vmatpush1.msra.mxu0 %v127
    %629 = vmatprep.subr.mxu0 0.0
    %630 = vmatpush1.msra.mxu0 0.0
    %631 = vmatprep.subr.mxu0 0.0
    %632 = vmatpush1.msra.mxu0 0.0
    %633 = vmatprep.subr.mxu0 0.0
    %634 = vmatpush1.msra.mxu0 0.0
    %635 = vmatprep.subr.mxu0 0.0
    %636 = vmatpush1.msra.mxu0 0.0
    %637 = vmatprep.subr.mxu0 0.0
    %638 = vmatpush1.msra.mxu0 0.0
    %639 = vmatprep.subr.mxu0 0.0
    %640 = vmatpush1.msra.mxu0 0.0
    %641 = vmatprep.subr.mxu0 0.0
    %642 = vmatpush1.msra.mxu0 0.0
    %643 = vmatprep.subr.mxu0 0.0
    %644 = vmatpush1.msra.mxu0 0.0
    %645 = vmatprep.subr.mxu0 0.0
    %646 = vmatpush1.msra.mxu0 0.0
    %647 = vmatprep.subr.mxu0 0.0
    %648 = vmatpush1.msra.mxu0 0.0
    %649 = vmatprep.subr.mxu0 0.0
    %650 = vmatpush1.msra.mxu0 0.0
    %651 = vmatprep.subr.mxu0 0.0
    %652 = vmatpush1.msra.mxu0 0.0
    %653 = vmatprep.subr.mxu0 0.0
    %654 = vmatpush1.msra.mxu0 0.0
    %655 = vmatprep.subr.mxu0 0.0
    %656 = vmatpush1.msra.mxu0 0.0
    %657 = vmatprep.subr.mxu0 0.0
    %658 = vmatpush1.msra.mxu0 0.0
    %659 = vmatprep.subr.mxu0 0.0
    %660 = vmatpush1.msra.mxu0 0.0
    %661 = vmatprep.subr.mxu0 0.0
    %662 = vmatpush1.msra.mxu0 0.0
    %663 = vmatprep.subr.mxu0 0.0
    %664 = vmatpush1.msra.mxu0 0.0
    %665 = vmatprep.subr.mxu0 0.0
    %666 = vmatpush1.msra.mxu0 0.0
    %667 = vmatprep.subr.mxu0 0.0
    %668 = vmatpush1.msra.mxu0 0.0
    %669 = vmatprep.subr.mxu0 0.0
    %670 = vmatpush1.msra.mxu0 0.0
    %671 = vmatprep.subr.mxu0 0.0
    %672 = vmatpush1.msra.mxu0 0.0
    %673 = vmatprep.subr.mxu0 0.0
    %674 = vmatpush1.msra.mxu0 0.0
    %675 = vmatprep.subr.mxu0 0.0
    %676 = vmatpush1.msra.mxu0 0.0
    %677 = vmatprep.subr.mxu0 0.0
    %678 = vmatpush1.msra.mxu0 0.0
    %679 = vmatprep.subr.mxu0 0.0
    %680 = vmatpush1.msra.mxu0 0.0
    %681 = vmatprep.subr.mxu0 0.0
    %682 = vmatpush1.msra.mxu0 0.0
    %683 = vmatprep.subr.mxu0 0.0
    %684 = vmatpush1.msra.mxu0 0.0
    %685 = vmatprep.subr.mxu0 0.0
    %686 = vmatpush1.msra.mxu0 0.0
    %687 = vmatprep.subr.mxu0 0.0
    %688 = vmatpush1.msra.mxu0 0.0
    %689 = vmatprep.mubr.f32.mxu0 0.0
    %690 = vmatmul.mubr.f32.gmra.mrb[0].mxu0 %v620
    %v691 = vpop.f32.mrb[0].mxu0
    %v692 = vadd.f32 0.0, %v691
    %v693 = vpop.f32.mrb[0].mxu0
    %694 = vmatprep.mubr.f32.mxu0 0.0
    %695 = vmatmul.mubr.f32.gmra.mrb[0].mxu0 %v623
    %v696 = vpop.f32.mrb[0].mxu0
    %v697 = vadd.f32 0.0, %v696
    %v698 = vpop.f32.mrb[0].mxu0
    %699 = vdwg.mxu0
    %v700 = vmul.f32 %v518, 1.1
    %v701 = vmul.f32 %v523, 1.1
    %v702 = vmul.f32 %v692, 0.1
    %v703 = vmul.f32 %v697, 0.1
    %v704 = vsub.f32 %v700, %v702
    %v705 = vsub.f32 %v701, %v703
    %v706 = vmul.f32 %v126, 0.5
    %v707 = vmul.f32 %v127, 0.5
    %v708 = vmul.f32 %v704, 0.5
    %v709 = vmul.f32 %v705, 0.5
    %v710 = vadd.f32 %v706, %v708
    %v711 = vadd.f32 %v707, %v709
    %v712 = vtanh.pop %v710
    %v713 = vtanh.pop %v711
    %714 = vst [vmem:[#allocation2] sm:$0xff] %v518
    %715 = vst [vmem:[#allocation2 + $0x8] sm:$0xff] %v523
    %716 = vst.msk [vmem:[#allocation2] sm:$0xff] %vm303, %v712
    %717 = vst.msk [vmem:[#allocation2 + $0x8] sm:$0xff] %vm303, %v713
    %v718 = vld [vmem:[#allocation2] sm:$0xff]
    %v719 = vld [vmem:[#allocation2 + $0x8] sm:$0xff]
    %v721 = vsel %vm303, %v712, 0
    %v724 = vsel %vm303, %v713, 0
    %726 = vmatprep.subr.mxu0 0.0
    %727 = vmatpush1.msra.mxu0 %v24
    %728 = vmatprep.subr.mxu0 0.0
    %729 = vmatpush1.msra.mxu0 %v25
    %730 = vmatprep.subr.mxu0 0.0
    %731 = vmatpush1.msra.mxu0 0.0
    %732 = vmatprep.subr.mxu0 0.0
    %733 = vmatpush1.msra.mxu0 0.0
    %734 = vmatprep.subr.mxu0 0.0
    %735 = vmatpush1.msra.mxu0 0.0
    %736 = vmatprep.subr.mxu0 0.0
    %737 = vmatpush1.msra.mxu0 0.0
    %738 = vmatprep.subr.mxu0 0.0
    %739 = vmatpush1.msra.mxu0 0.0
    %740 = vmatprep.subr.mxu0 0.0
    %741 = vmatpush1.msra.mxu0 0.0
    %742 = vmatprep.subr.mxu0 0.0
    %743 = vmatpush1.msra.mxu0 0.0
    %744 = vmatprep.subr.mxu0 0.0
    %745 = vmatpush1.msra.mxu0 0.0
    %746 = vmatprep.subr.mxu0 0.0
    %747 = vmatpush1.msra.mxu0 0.0
    %748 = vmatprep.subr.mxu0 0.0
    %749 = vmatpush1.msra.mxu0 0.0
    %750 = vmatprep.subr.mxu0 0.0
    %751 = vmatpush1.msra.mxu0 0.0
    %752 = vmatprep.subr.mxu0 0.0
    %753 = vmatpush1.msra.mxu0 0.0
    %754 = vmatprep.subr.mxu0 0.0
    %755 = vmatpush1.msra.mxu0 0.0
    %756 = vmatprep.subr.mxu0 0.0
    %757 = vmatpush1.msra.mxu0 0.0
    %758 = vmatprep.subr.mxu0 0.0
    %759 = vmatpush1.msra.mxu0 0.0
    %760 = vmatprep.subr.mxu0 0.0
    %761 = vmatpush1.msra.mxu0 0.0
    %762 = vmatprep.subr.mxu0 0.0
    %763 = vmatpush1.msra.mxu0 0.0
    %764 = vmatprep.subr.mxu0 0.0
    %765 = vmatpush1.msra.mxu0 0.0
    %766 = vmatprep.subr.mxu0 0.0
    %767 = vmatpush1.msra.mxu0 0.0
    %768 = vmatprep.subr.mxu0 0.0
    %769 = vmatpush1.msra.mxu0 0.0
    %770 = vmatprep.subr.mxu0 0.0
    %771 = vmatpush1.msra.mxu0 0.0
    %772 = vmatprep.subr.mxu0 0.0
    %773 = vmatpush1.msra.mxu0 0.0
    %774 = vmatprep.subr.mxu0 0.0
    %775 = vmatpush1.msra.mxu0 0.0
    %776 = vmatprep.subr.mxu0 0.0
    %777 = vmatpush1.msra.mxu0 0.0
    %778 = vmatprep.subr.mxu0 0.0
    %779 = vmatpush1.msra.mxu0 0.0
    %780 = vmatprep.subr.mxu0 0.0
    %781 = vmatpush1.msra.mxu0 0.0
    %782 = vmatprep.subr.mxu0 0.0
    %783 = vmatpush1.msra.mxu0 0.0
    %784 = vmatprep.subr.mxu0 0.0
    %785 = vmatpush1.msra.mxu0 0.0
    %786 = vmatprep.subr.mxu0 0.0
    %787 = vmatpush1.msra.mxu0 0.0
    %788 = vmatprep.subr.mxu0 0.0
    %789 = vmatpush1.msra.mxu0 0.0
    %790 = vmatprep.mubr.f32.mxu0 0.0
    %791 = vmatmul.mubr.f32.gmra.mrb[0].mxu0 %v721
    %v792 = vpop.f32.mrb[0].mxu0
    %v793 = vadd.f32 0.0, %v792
    %v794 = vpop.f32.mrb[0].mxu0
    %795 = vmatprep.mubr.f32.mxu0 0.0
    %796 = vmatmul.mubr.f32.gmra.mrb[0].mxu0 %v724
    %v797 = vpop.f32.mrb[0].mxu0
    %v798 = vadd.f32 0.0, %v797
    %v799 = vpop.f32.mrb[0].mxu0
    %800 = vdwg.mxu0
    %v801 = vadd.f32 %v793, %v35
    %v802 = vadd.f32 %v798, %v35
    %v803 = vadd.f32 %v793, %v411
    %v804 = vadd.f32 %v798, %v411
    %v805 = vtanh.pop %v803
    %v806 = vtanh.pop %v804
    %809 = vrot.lane.b32.xlu0 %v805, 112
    %v810 = vpop.permute.xlu0 %809
    %811 = vrot.lane.b32.xlu0 %v806, 112
    %v812 = vpop.permute.xlu0 %811
    %v815 = vmul.f32 %v420, %v810
    %v816 = vmul.f32 %v420, %v812
    %818 = vset.pattern.permute.xlu0 1
    %819 = vperm.xlu0 %818, %v815
    %v820 = vpop.permute.xlu0 %819
    %823 = vset.pattern.permute.xlu0 1
    %824 = vperm.xlu0 %823, %v816
    %v825 = vpop.permute.xlu0 %824
    %v827 = vmul.f32 %v820, %v718
    %v828 = vmul.f32 %v825, %v719
    %v829 = vadd.f32 %v443, %v827
    %v830 = vadd.f32 %v444, %v828
    %831 = vmatprep.subr.mxu0 0.0
    %832 = vmatpush1.msra.mxu0 %v718
    %833 = vmatprep.subr.mxu0 0.0
    %834 = vmatpush1.msra.mxu0 %v719
    %835 = vmatprep.subr.mxu0 0.0
    %836 = vmatpush1.msra.mxu0 0.0
    %837 = vmatprep.subr.mxu0 0.0
    %838 = vmatpush1.msra.mxu0 0.0
    %839 = vmatprep.subr.mxu0 0.0
    %840 = vmatpush1.msra.mxu0 0.0
    %841 = vmatprep.subr.mxu0 0.0
    %842 = vmatpush1.msra.mxu0 0.0
    %843 = vmatprep.subr.mxu0 0.0
    %844 = vmatpush1.msra.mxu0 0.0
    %845 = vmatprep.subr.mxu0 0.0
    %846 = vmatpush1.msra.mxu0 0.0
    %847 = vmatprep.subr.mxu0 0.0
    %848 = vmatpush1.msra.mxu0 0.0
    %849 = vmatprep.subr.mxu0 0.0
    %850 = vmatpush1.msra.mxu0 0.0
    %851 = vmatprep.subr.mxu0 0.0
    %852 = vmatpush1.msra.mxu0 0.0
    %853 = vmatprep.subr.mxu0 0.0
    %854 = vmatpush1.msra.mxu0 0.0
    %855 = vmatprep.subr.mxu0 0.0
    %856 = vmatpush1.msra.mxu0 0.0
    %857 = vmatprep.subr.mxu0 0.0
    %858 = vmatpush1.msra.mxu0 0.0
    %859 = vmatprep.subr.mxu0 0.0
    %860 = vmatpush1.msra.mxu0 0.0
    %861 = vmatprep.subr.mxu0 0.0
    %862 = vmatpush1.msra.mxu0 0.0
    %863 = vmatprep.subr.mxu0 0.0
    %864 = vmatpush1.msra.mxu0 0.0
    %865 = vmatprep.subr.mxu0 0.0
    %866 = vmatpush1.msra.mxu0 0.0
    %867 = vmatprep.subr.mxu0 0.0
    %868 = vmatpush1.msra.mxu0 0.0
    %869 = vmatprep.subr.mxu0 0.0
    %870 = vmatpush1.msra.mxu0 0.0
    %871 = vmatprep.subr.mxu0 0.0
    %872 = vmatpush1.msra.mxu0 0.0
    %873 = vmatprep.subr.mxu0 0.0
    %874 = vmatpush1.msra.mxu0 0.0
    %875 = vmatprep.subr.mxu0 0.0
    %876 = vmatpush1.msra.mxu0 0.0
    %877 = vmatprep.subr.mxu0 0.0
    %878 = vmatpush1.msra.mxu0 0.0
    %879 = vmatprep.subr.mxu0 0.0
    %880 = vmatpush1.msra.mxu0 0.0
    %881 = vmatprep.subr.mxu0 0.0
    %882 = vmatpush1.msra.mxu0 0.0
    %883 = vmatprep.subr.mxu0 0.0
    %884 = vmatpush1.msra.mxu0 0.0
    %885 = vmatprep.subr.mxu0 0.0
    %886 = vmatpush1.msra.mxu0 0.0
    %887 = vmatprep.subr.mxu0 0.0
    %888 = vmatpush1.msra.mxu0 0.0
    %889 = vmatprep.subr.mxu0 0.0
    %890 = vmatpush1.msra.mxu0 0.0
    %891 = vmatprep.subr.mxu0 0.0
    %892 = vmatpush1.msra.mxu0 0.0
    %893 = vmatprep.subr.mxu0 0.0
    %894 = vmatpush1.msra.mxu0 0.0
    %895 = vmatprep.mubr.f32.mxu0 0.0
    %896 = vmatmul.mubr.f32.gmra.mrb[0].mxu0 %v446
    %v897 = vpop.f32.mrb[0].mxu0
    %v898 = vadd.f32 0.0, %v897
    %v899 = vpop.f32.mrb[0].mxu0
    %900 = vmatprep.mubr.f32.mxu0 0.0
    %901 = vmatmul.mubr.f32.gmra.mrb[0].mxu0 %v449
    %v902 = vpop.f32.mrb[0].mxu0
    %v903 = vadd.f32 0.0, %v902
    %v904 = vpop.f32.mrb[0].mxu0
    %905 = vdwg.mxu0
    %v907 = vsel %vm303, %v801, 0
    %v910 = vsel %vm303, %v802, 0
    %912 = vmatprep.subr.mxu0 0.0
    %913 = vmatpush1.xpose.msra.mxu0 %v907
    %914 = vmatprep.subr.mxu0 0.0
    %915 = vmatpush1.xpose.msra.mxu0 %v910
    %916 = vmatprep.subr.mxu0 0.0
    %917 = vmatpush1.xpose.msra.mxu0 0.0
    %918 = vmatprep.subr.mxu0 0.0
    %919 = vmatpush1.xpose.msra.mxu0 0.0
    %920 = vmatprep.subr.mxu0 0.0
    %921 = vmatpush1.xpose.msra.mxu0 0.0
    %922 = vmatprep.subr.mxu0 0.0
    %923 = vmatpush1.xpose.msra.mxu0 0.0
    %924 = vmatprep.subr.mxu0 0.0
    %925 = vmatpush1.xpose.msra.mxu0 0.0
    %926 = vmatprep.subr.mxu0 0.0
    %927 = vmatpush1.xpose.msra.mxu0 0.0
    %928 = vmatprep.subr.mxu0 0.0
    %929 = vmatpush1.xpose.msra.mxu0 0.0
    %930 = vmatprep.subr.mxu0 0.0
    %931 = vmatpush1.xpose.msra.mxu0 0.0
    %932 = vmatprep.subr.mxu0 0.0
    %933 = vmatpush1.xpose.msra.mxu0 0.0
    %934 = vmatprep.subr.mxu0 0.0
    %935 = vmatpush1.xpose.msra.mxu0 0.0
    %936 = vmatprep.subr.mxu0 0.0
    %937 = vmatpush1.xpose.msra.mxu0 0.0
    %938 = vmatprep.subr.mxu0 0.0
    %939 = vmatpush1.xpose.msra.mxu0 0.0
    %940 = vmatprep.subr.mxu0 0.0
    %941 = vmatpush1.xpose.msra.mxu0 0.0
    %942 = vmatprep.subr.mxu0 0.0
    %943 = vmatpush1.xpose.msra.mxu0 0.0
    %944 = vmatprep.subr.mxu0 0.0
    %945 = vmatpush1.xpose.msra.mxu0 0.0
    %946 = vmatprep.subr.mxu0 0.0
    %947 = vmatpush1.xpose.msra.mxu0 0.0
    %948 = vmatprep.subr.mxu0 0.0
    %949 = vmatpush1.xpose.msra.mxu0 0.0
    %950 = vmatprep.subr.mxu0 0.0
    %951 = vmatpush1.xpose.msra.mxu0 0.0
    %952 = vmatprep.subr.mxu0 0.0
    %953 = vmatpush1.xpose.msra.mxu0 0.0
    %954 = vmatprep.subr.mxu0 0.0
    %955 = vmatpush1.xpose.msra.mxu0 0.0
    %956 = vmatprep.subr.mxu0 0.0
    %957 = vmatpush1.xpose.msra.mxu0 0.0
    %958 = vmatprep.subr.mxu0 0.0
    %959 = vmatpush1.xpose.msra.mxu0 0.0
    %960 = vmatprep.subr.mxu0 0.0
    %961 = vmatpush1.xpose.msra.mxu0 0.0
    %962 = vmatprep.subr.mxu0 0.0
    %963 = vmatpush1.xpose.msra.mxu0 0.0
    %964 = vmatprep.subr.mxu0 0.0
    %965 = vmatpush1.xpose.msra.mxu0 0.0
    %966 = vmatprep.subr.mxu0 0.0
    %967 = vmatpush1.xpose.msra.mxu0 0.0
    %968 = vmatprep.subr.mxu0 0.0
    %969 = vmatpush1.xpose.msra.mxu0 0.0
    %970 = vmatprep.subr.mxu0 0.0
    %971 = vmatpush1.xpose.msra.mxu0 0.0
    %972 = vmatprep.subr.mxu0 0.0
    %973 = vmatpush1.xpose.msra.mxu0 0.0
    %974 = vmatprep.subr.mxu0 0.0
    %975 = vmatpush1.xpose.msra.mxu0 0.0
    %976 = vmatprep.mubr.f32.mxu0 0.0
    %977 = vmatmul.mubr.f32.gmra.mrb[0].mxu0 %v907
    %v978 = vpop.f32.mrb[0].mxu0
    %v979 = vadd.f32 0.0, %v978
    %v980 = vpop.f32.mrb[0].mxu0
    %981 = vmatprep.mubr.f32.mxu0 0.0
    %982 = vmatmul.mubr.f32.gmra.mrb[0].mxu0 %v910
    %v983 = vpop.f32.mrb[0].mxu0
    %v984 = vadd.f32 0.0, %v983
    %v985 = vpop.f32.mrb[0].mxu0
    %986 = vdwg.mxu0
    %v987 = vxor.u32 %v979, 2147483648
    %v988 = vxor.u32 %v984, 2147483648
    %v989 = vmul.f32 %v987, 1.442695
    %v990 = vpow.pop %v989
    %v991 = vmul.f32 %v988, 1.442695
    %v992 = vpow.pop %v991
    %v993 = vadd.f32 %v990, 1.0
    %v994 = vadd.f32 %v992, 1.0
    %v995 = vrcp.pop %v993
    %v996 = vmul.f32 1.0, %v995
    %v997 = vrcp.pop %v994
    %v998 = vmul.f32 1.0, %v997
    %v1000 = vsel %vm303, %v996, 0
    %v1003 = vsel %vm303, %v998, 0
    %1005 = vmatprep.subr.mxu0 0.0
    %1006 = vmatpush1.msra.mxu0 %v712
    %1007 = vmatprep.subr.mxu0 0.0
    %1008 = vmatpush1.msra.mxu0 %v713
    %1009 = vmatprep.subr.mxu0 0.0
    %1010 = vmatpush1.msra.mxu0 0.0
    %1011 = vmatprep.subr.mxu0 0.0
    %1012 = vmatpush1.msra.mxu0 0.0
    %1013 = vmatprep.subr.mxu0 0.0
    %1014 = vmatpush1.msra.mxu0 0.0
    %1015 = vmatprep.subr.mxu0 0.0
    %1016 = vmatpush1.msra.mxu0 0.0
    %1017 = vmatprep.subr.mxu0 0.0
    %1018 = vmatpush1.msra.mxu0 0.0
    %1019 = vmatprep.subr.mxu0 0.0
    %1020 = vmatpush1.msra.mxu0 0.0
    %1021 = vmatprep.subr.mxu0 0.0
    %1022 = vmatpush1.msra.mxu0 0.0
    %1023 = vmatprep.subr.mxu0 0.0
    %1024 = vmatpush1.msra.mxu0 0.0
    %1025 = vmatprep.subr.mxu0 0.0
    %1026 = vmatpush1.msra.mxu0 0.0
    %1027 = vmatprep.subr.mxu0 0.0
    %1028 = vmatpush1.msra.mxu0 0.0
    %1029 = vmatprep.subr.mxu0 0.0
    %1030 = vmatpush1.msra.mxu0 0.0
    %1031 = vmatprep.subr.mxu0 0.0
    %1032 = vmatpush1.msra.mxu0 0.0
    %1033 = vmatprep.subr.mxu0 0.0
    %1034 = vmatpush1.msra.mxu0 0.0
    %1035 = vmatprep.subr.mxu0 0.0
    %1036 = vmatpush1.msra.mxu0 0.0
    %1037 = vmatprep.subr.mxu0 0.0
    %1038 = vmatpush1.msra.mxu0 0.0
    %1039 = vmatprep.subr.mxu0 0.0
    %1040 = vmatpush1.msra.mxu0 0.0
    %1041 = vmatprep.subr.mxu0 0.0
    %1042 = vmatpush1.msra.mxu0 0.0
    %1043 = vmatprep.subr.mxu0 0.0
    %1044 = vmatpush1.msra.mxu0 0.0
    %1045 = vmatprep.subr.mxu0 0.0
    %1046 = vmatpush1.msra.mxu0 0.0
    %1047 = vmatprep.subr.mxu0 0.0
    %1048 = vmatpush1.msra.mxu0 0.0
    %1049 = vmatprep.subr.mxu0 0.0
    %1050 = vmatpush1.msra.mxu0 0.0
    %1051 = vmatprep.subr.mxu0 0.0
    %1052 = vmatpush1.msra.mxu0 0.0
    %1053 = vmatprep.subr.mxu0 0.0
    %1054 = vmatpush1.msra.mxu0 0.0
    %1055 = vmatprep.subr.mxu0 0.0
    %1056 = vmatpush1.msra.mxu0 0.0
    %1057 = vmatprep.subr.mxu0 0.0
    %1058 = vmatpush1.msra.mxu0 0.0
    %1059 = vmatprep.subr.mxu0 0.0
    %1060 = vmatpush1.msra.mxu0 0.0
    %1061 = vmatprep.subr.mxu0 0.0
    %1062 = vmatpush1.msra.mxu0 0.0
    %1063 = vmatprep.subr.mxu0 0.0
    %1064 = vmatpush1.msra.mxu0 0.0
    %1065 = vmatprep.subr.mxu0 0.0
    %1066 = vmatpush1.msra.mxu0 0.0
    %1067 = vmatprep.subr.mxu0 0.0
    %1068 = vmatpush1.msra.mxu0 0.0
    %1069 = vmatprep.mubr.f32.mxu0 0.0
    %1070 = vmatmul.mubr.f32.gmra.mrb[0].mxu0 %v1000
    %v1071 = vpop.f32.mrb[0].mxu0
    %v1072 = vadd.f32 0.0, %v1071
    %v1073 = vpop.f32.mrb[0].mxu0
    %1074 = vmatprep.mubr.f32.mxu0 0.0
    %1075 = vmatmul.mubr.f32.gmra.mrb[0].mxu0 %v1003
    %v1076 = vpop.f32.mrb[0].mxu0
    %v1077 = vadd.f32 0.0, %v1076
    %v1078 = vpop.f32.mrb[0].mxu0
    %1079 = vdwg.mxu0
    %v1080 = vmul.f32 %v898, 1.1
    %v1081 = vmul.f32 %v903, 1.1
    %v1082 = vmul.f32 %v1072, 0.1
    %v1083 = vmul.f32 %v1077, 0.1
    %v1084 = vsub.f32 %v1080, %v1082
    %v1085 = vsub.f32 %v1081, %v1083
    %v1086 = vmul.f32 %v1084, 0.5
    %v1087 = vmul.f32 %v1085, 0.5
    %v1088 = vadd.f32 %v706, %v1086
    %v1089 = vadd.f32 %v707, %v1087
    %v1090 = vtanh.pop %v1088
    %v1091 = vtanh.pop %v1089
    %1092 = vst [vmem:[#allocation2] sm:$0xff] %v898
    %1093 = vst [vmem:[#allocation2 + $0x8] sm:$0xff] %v903
    %1094 = vst.msk [vmem:[#allocation2] sm:$0xff] %vm303, %v1090
    %1095 = vst.msk [vmem:[#allocation2 + $0x8] sm:$0xff] %vm303, %v1091
    %v1096 = vld [vmem:[#allocation2] sm:$0xff]
    %v1097 = vld [vmem:[#allocation2 + $0x8] sm:$0xff]
    %v1099 = vsel %vm303, %v1090, 0
    %v1102 = vsel %vm303, %v1091, 0
    %1104 = vmatprep.subr.mxu0 0.0
    %1105 = vmatpush1.msra.mxu0 %v24
    %1106 = vmatprep.subr.mxu0 0.0
    %1107 = vmatpush1.msra.mxu0 %v25
    %1108 = vmatprep.subr.mxu0 0.0
    %1109 = vmatpush1.msra.mxu0 0.0
    %1110 = vmatprep.subr.mxu0 0.0
    %1111 = vmatpush1.msra.mxu0 0.0
    %1112 = vmatprep.subr.mxu0 0.0
    %1113 = vmatpush1.msra.mxu0 0.0
    %1114 = vmatprep.subr.mxu0 0.0
    %1115 = vmatpush1.msra.mxu0 0.0
    %1116 = vmatprep.subr.mxu0 0.0
    %1117 = vmatpush1.msra.mxu0 0.0
    %1118 = vmatprep.subr.mxu0 0.0
    %1119 = vmatpush1.msra.mxu0 0.0
    %1120 = vmatprep.subr.mxu0 0.0
    %1121 = vmatpush1.msra.mxu0 0.0
    %1122 = vmatprep.subr.mxu0 0.0
    %1123 = vmatpush1.msra.mxu0 0.0
    %1124 = vmatprep.subr.mxu0 0.0
    %1125 = vmatpush1.msra.mxu0 0.0
    %1126 = vmatprep.subr.mxu0 0.0
    %1127 = vmatpush1.msra.mxu0 0.0
    %1128 = vmatprep.subr.mxu0 0.0
    %1129 = vmatpush1.msra.mxu0 0.0
    %1130 = vmatprep.subr.mxu0 0.0
    %1131 = vmatpush1.msra.mxu0 0.0
    %1132 = vmatprep.subr.mxu0 0.0
    %1133 = vmatpush1.msra.mxu0 0.0
    %1134 = vmatprep.subr.mxu0 0.0
    %1135 = vmatpush1.msra.mxu0 0.0
    %1136 = vmatprep.subr.mxu0 0.0
    %1137 = vmatpush1.msra.mxu0 0.0
    %1138 = vmatprep.subr.mxu0 0.0
    %1139 = vmatpush1.msra.mxu0 0.0
    %1140 = vmatprep.subr.mxu0 0.0
    %1141 = vmatpush1.msra.mxu0 0.0
    %1142 = vmatprep.subr.mxu0 0.0
    %1143 = vmatpush1.msra.mxu0 0.0
    %1144 = vmatprep.subr.mxu0 0.0
    %1145 = vmatpush1.msra.mxu0 0.0
    %1146 = vmatprep.subr.mxu0 0.0
    %1147 = vmatpush1.msra.mxu0 0.0
    %1148 = vmatprep.subr.mxu0 0.0
    %1149 = vmatpush1.msra.mxu0 0.0
    %1150 = vmatprep.subr.mxu0 0.0
    %1151 = vmatpush1.msra.mxu0 0.0
    %1152 = vmatprep.subr.mxu0 0.0
    %1153 = vmatpush1.msra.mxu0 0.0
    %1154 = vmatprep.subr.mxu0 0.0
    %1155 = vmatpush1.msra.mxu0 0.0
    %1156 = vmatprep.subr.mxu0 0.0
    %1157 = vmatpush1.msra.mxu0 0.0
    %1158 = vmatprep.subr.mxu0 0.0
    %1159 = vmatpush1.msra.mxu0 0.0
    %1160 = vmatprep.subr.mxu0 0.0
    %1161 = vmatpush1.msra.mxu0 0.0
    %1162 = vmatprep.subr.mxu0 0.0
    %1163 = vmatpush1.msra.mxu0 0.0
    %1164 = vmatprep.subr.mxu0 0.0
    %1165 = vmatpush1.msra.mxu0 0.0
    %1166 = vmatprep.subr.mxu0 0.0
    %1167 = vmatpush1.msra.mxu0 0.0
    %1168 = vmatprep.mubr.f32.mxu0 0.0
    %1169 = vmatmul.mubr.f32.gmra.mrb[0].mxu0 %v1099
    %v1170 = vpop.f32.mrb[0].mxu0
    %v1171 = vadd.f32 0.0, %v1170
    %v1172 = vpop.f32.mrb[0].mxu0
    %1173 = vmatprep.mubr.f32.mxu0 0.0
    %1174 = vmatmul.mubr.f32.gmra.mrb[0].mxu0 %v1102
    %v1175 = vpop.f32.mrb[0].mxu0
    %v1176 = vadd.f32 0.0, %v1175
    %v1177 = vpop.f32.mrb[0].mxu0
    %1178 = vdwg.mxu0
    %v1179 = vadd.f32 %v1171, %v35
    %v1180 = vadd.f32 %v1176, %v35
    %v1181 = vadd.f32 %v1171, %v411
    %v1182 = vadd.f32 %v1176, %v411
    %v1183 = vtanh.pop %v1181
    %v1184 = vtanh.pop %v1182
    %1187 = vrot.lane.b32.xlu0 %v1183, 112
    %v1188 = vpop.permute.xlu0 %1187
    %1189 = vrot.lane.b32.xlu0 %v1184, 112
    %v1190 = vpop.permute.xlu0 %1189
    %v1193 = vmul.f32 %v420, %v1188
    %v1194 = vmul.f32 %v420, %v1190
    %1196 = vset.pattern.permute.xlu0 2
    %1197 = vperm.xlu0 %1196, %v1193
    %v1198 = vpop.permute.xlu0 %1197
    %1201 = vset.pattern.permute.xlu0 2
    %1202 = vperm.xlu0 %1201, %v1194
    %v1203 = vpop.permute.xlu0 %1202
    %v1205 = vmul.f32 %v1198, %v1096
    %v1206 = vmul.f32 %v1203, %v1097
    %v1207 = vadd.f32 %v829, %v1205
    %v1208 = vadd.f32 %v830, %v1206
    %1209 = vmatprep.subr.mxu0 0.0
    %1210 = vmatpush1.msra.mxu0 %v1096
    %1211 = vmatprep.subr.mxu0 0.0
    %1212 = vmatpush1.msra.mxu0 %v1097
    %1213 = vmatprep.subr.mxu0 0.0
    %1214 = vmatpush1.msra.mxu0 0.0
    %1215 = vmatprep.subr.mxu0 0.0
    %1216 = vmatpush1.msra.mxu0 0.0
    %1217 = vmatprep.subr.mxu0 0.0
    %1218 = vmatpush1.msra.mxu0 0.0
    %1219 = vmatprep.subr.mxu0 0.0
    %1220 = vmatpush1.msra.mxu0 0.0
    %1221 = vmatprep.subr.mxu0 0.0
    %1222 = vmatpush1.msra.mxu0 0.0
    %1223 = vmatprep.subr.mxu0 0.0
    %1224 = vmatpush1.msra.mxu0 0.0
    %1225 = vmatprep.subr.mxu0 0.0
    %1226 = vmatpush1.msra.mxu0 0.0
    %1227 = vmatprep.subr.mxu0 0.0
    %1228 = vmatpush1.msra.mxu0 0.0
    %1229 = vmatprep.subr.mxu0 0.0
    %1230 = vmatpush1.msra.mxu0 0.0
    %1231 = vmatprep.subr.mxu0 0.0
    %1232 = vmatpush1.msra.mxu0 0.0
    %1233 = vmatprep.subr.mxu0 0.0
    %1234 = vmatpush1.msra.mxu0 0.0
    %1235 = vmatprep.subr.mxu0 0.0
    %1236 = vmatpush1.msra.mxu0 0.0
    %1237 = vmatprep.subr.mxu0 0.0
    %1238 = vmatpush1.msra.mxu0 0.0
    %1239 = vmatprep.subr.mxu0 0.0
    %1240 = vmatpush1.msra.mxu0 0.0
    %1241 = vmatprep.subr.mxu0 0.0
    %1242 = vmatpush1.msra.mxu0 0.0
    %1243 = vmatprep.subr.mxu0 0.0
    %1244 = vmatpush1.msra.mxu0 0.0
    %1245 = vmatprep.subr.mxu0 0.0
    %1246 = vmatpush1.msra.mxu0 0.0
    %1247 = vmatprep.subr.mxu0 0.0
    %1248 = vmatpush1.msra.mxu0 0.0
    %1249 = vmatprep.subr.mxu0 0.0
    %1250 = vmatpush1.msra.mxu0 0.0
    %1251 = vmatprep.subr.mxu0 0.0
    %1252 = vmatpush1.msra.mxu0 0.0
    %1253 = vmatprep.subr.mxu0 0.0
    %1254 = vmatpush1.msra.mxu0 0.0
    %1255 = vmatprep.subr.mxu0 0.0
    %1256 = vmatpush1.msra.mxu0 0.0
    %1257 = vmatprep.subr.mxu0 0.0
    %1258 = vmatpush1.msra.mxu0 0.0
    %1259 = vmatprep.subr.mxu0 0.0
    %1260 = vmatpush1.msra.mxu0 0.0
    %1261 = vmatprep.subr.mxu0 0.0
    %1262 = vmatpush1.msra.mxu0 0.0
    %1263 = vmatprep.subr.mxu0 0.0
    %1264 = vmatpush1.msra.mxu0 0.0
    %1265 = vmatprep.subr.mxu0 0.0
    %1266 = vmatpush1.msra.mxu0 0.0
    %1267 = vmatprep.subr.mxu0 0.0
    %1268 = vmatpush1.msra.mxu0 0.0
    %1269 = vmatprep.subr.mxu0 0.0
    %1270 = vmatpush1.msra.mxu0 0.0
    %1271 = vmatprep.subr.mxu0 0.0
    %1272 = vmatpush1.msra.mxu0 0.0
    %1273 = vmatprep.mubr.f32.mxu0 0.0
    %1274 = vmatmul.mubr.f32.gmra.mrb[0].mxu0 %v446
    %v1275 = vpop.f32.mrb[0].mxu0
    %v1276 = vadd.f32 0.0, %v1275
    %v1277 = vpop.f32.mrb[0].mxu0
    %1278 = vmatprep.mubr.f32.mxu0 0.0
    %1279 = vmatmul.mubr.f32.gmra.mrb[0].mxu0 %v449
    %v1280 = vpop.f32.mrb[0].mxu0
    %v1281 = vadd.f32 0.0, %v1280
    %v1282 = vpop.f32.mrb[0].mxu0
    %1283 = vdwg.mxu0
    %v1285 = vsel %vm303, %v1179, 0
    %v1288 = vsel %vm303, %v1180, 0
    %1290 = vmatprep.subr.mxu0 0.0
    %1291 = vmatpush1.xpose.msra.mxu0 %v1285
    %1292 = vmatprep.subr.mxu0 0.0
    %1293 = vmatpush1.xpose.msra.mxu0 %v1288
    %1294 = vmatprep.subr.mxu0 0.0
    %1295 = vmatpush1.xpose.msra.mxu0 0.0
    %1296 = vmatprep.subr.mxu0 0.0
    %1297 = vmatpush1.xpose.msra.mxu0 0.0
    %1298 = vmatprep.subr.mxu0 0.0
    %1299 = vmatpush1.xpose.msra.mxu0 0.0
    %1300 = vmatprep.subr.mxu0 0.0
    %1301 = vmatpush1.xpose.msra.mxu0 0.0
    %1302 = vmatprep.subr.mxu0 0.0
    %1303 = vmatpush1.xpose.msra.mxu0 0.0
    %1304 = vmatprep.subr.mxu0 0.0
    %1305 = vmatpush1.xpose.msra.mxu0 0.0
    %1306 = vmatprep.subr.mxu0 0.0
    %1307 = vmatpush1.xpose.msra.mxu0 0.0
    %1308 = vmatprep.subr.mxu0 0.0
    %1309 = vmatpush1.xpose.msra.mxu0 0.0
    %1310 = vmatprep.subr.mxu0 0.0
    %1311 = vmatpush1.xpose.msra.mxu0 0.0
    %1312 = vmatprep.subr.mxu0 0.0
    %1313 = vmatpush1.xpose.msra.mxu0 0.0
    %1314 = vmatprep.subr.mxu0 0.0
    %1315 = vmatpush1.xpose.msra.mxu0 0.0
    %1316 = vmatprep.subr.mxu0 0.0
    %1317 = vmatpush1.xpose.msra.mxu0 0.0
    %1318 = vmatprep.subr.mxu0 0.0
    %1319 = vmatpush1.xpose.msra.mxu0 0.0
    %1320 = vmatprep.subr.mxu0 0.0
    %1321 = vmatpush1.xpose.msra.mxu0 0.0
    %1322 = vmatprep.subr.mxu0 0.0
    %1323 = vmatpush1.xpose.msra.mxu0 0.0
    %1324 = vmatprep.subr.mxu0 0.0
    %1325 = vmatpush1.xpose.msra.mxu0 0.0
    %1326 = vmatprep.subr.mxu0 0.0
    %1327 = vmatpush1.xpose.msra.mxu0 0.0
    %1328 = vmatprep.subr.mxu0 0.0
    %1329 = vmatpush1.xpose.msra.mxu0 0.0
    %1330 = vmatprep.subr.mxu0 0.0
    %1331 = vmatpush1.xpose.msra.mxu0 0.0
    %1332 = vmatprep.subr.mxu0 0.0
    %1333 = vmatpush1.xpose.msra.mxu0 0.0
    %1334 = vmatprep.subr.mxu0 0.0
    %1335 = vmatpush1.xpose.msra.mxu0 0.0
    %1336 = vmatprep.subr.mxu0 0.0
    %1337 = vmatpush1.xpose.msra.mxu0 0.0
    %1338 = vmatprep.subr.mxu0 0.0
    %1339 = vmatpush1.xpose.msra.mxu0 0.0
    %1340 = vmatprep.subr.mxu0 0.0
    %1341 = vmatpush1.xpose.msra.mxu0 0.0
    %1342 = vmatprep.subr.mxu0 0.0
    %1343 = vmatpush1.xpose.msra.mxu0 0.0
    %1344 = vmatprep.subr.mxu0 0.0
    %1345 = vmatpush1.xpose.msra.mxu0 0.0
    %1346 = vmatprep.subr.mxu0 0.0
    %1347 = vmatpush1.xpose.msra.mxu0 0.0
    %1348 = vmatprep.subr.mxu0 0.0
    %1349 = vmatpush1.xpose.msra.mxu0 0.0
    %1350 = vmatprep.subr.mxu0 0.0
    %1351 = vmatpush1.xpose.msra.mxu0 0.0
    %1352 = vmatprep.subr.mxu0 0.0
    %1353 = vmatpush1.xpose.msra.mxu0 0.0
    %1354 = vmatprep.mubr.f32.mxu0 0.0
    %1355 = vmatmul.mubr.f32.gmra.mrb[0].mxu0 %v1285
    %v1356 = vpop.f32.mrb[0].mxu0
    %v1357 = vadd.f32 0.0, %v1356
    %v1358 = vpop.f32.mrb[0].mxu0
    %1359 = vmatprep.mubr.f32.mxu0 0.0
    %1360 = vmatmul.mubr.f32.gmra.mrb[0].mxu0 %v1288
    %v1361 = vpop.f32.mrb[0].mxu0
    %v1362 = vadd.f32 0.0, %v1361
    %v1363 = vpop.f32.mrb[0].mxu0
    %1364 = vdwg.mxu0
    %v1365 = vxor.u32 %v1357, 2147483648
    %v1366 = vxor.u32 %v1362, 2147483648
    %v1367 = vmul.f32 %v1365, 1.442695
    %v1368 = vpow.pop %v1367
    %v1369 = vmul.f32 %v1366, 1.442695
    %v1370 = vpow.pop %v1369
    %v1371 = vadd.f32 %v1368, 1.0
    %v1372 = vadd.f32 %v1370, 1.0
    %v1373 = vrcp.pop %v1371
    %v1374 = vmul.f32 1.0, %v1373
    %v1375 = vrcp.pop %v1372
    %v1376 = vmul.f32 1.0, %v1375
    %v1378 = vsel %vm303, %v1374, 0
    %v1381 = vsel %vm303, %v1376, 0
    %1383 = vmatprep.subr.mxu0 0.0
    %1384 = vmatpush1.msra.mxu0 %v1090
    %1385 = vmatprep.subr.mxu0 0.0
    %1386 = vmatpush1.msra.mxu0 %v1091
    %1387 = vmatprep.subr.mxu0 0.0
    %1388 = vmatpush1.msra.mxu0 0.0
    %1389 = vmatprep.subr.mxu0 0.0
    %1390 = vmatpush1.msra.mxu0 0.0
    %1391 = vmatprep.subr.mxu0 0.0
    %1392 = vmatpush1.msra.mxu0 0.0
    %1393 = vmatprep.subr.mxu0 0.0
    %1394 = vmatpush1.msra.mxu0 0.0
    %1395 = vmatprep.subr.mxu0 0.0
    %1396 = vmatpush1.msra.mxu0 0.0
    %1397 = vmatprep.subr.mxu0 0.0
    %1398 = vmatpush1.msra.mxu0 0.0
    %1399 = vmatprep.subr.mxu0 0.0
    %1400 = vmatpush1.msra.mxu0 0.0
    %1401 = vmatprep.subr.mxu0 0.0
    %1402 = vmatpush1.msra.mxu0 0.0
    %1403 = vmatprep.subr.mxu0 0.0
    %1404 = vmatpush1.msra.mxu0 0.0
    %1405 = vmatprep.subr.mxu0 0.0
    %1406 = vmatpush1.msra.mxu0 0.0
    %1407 = vmatprep.subr.mxu0 0.0
    %1408 = vmatpush1.msra.mxu0 0.0
    %1409 = vmatprep.subr.mxu0 0.0
    %1410 = vmatpush1.msra.mxu0 0.0
    %1411 = vmatprep.subr.mxu0 0.0
    %1412 = vmatpush1.msra.mxu0 0.0
    %1413 = vmatprep.subr.mxu0 0.0
    %1414 = vmatpush1.msra.mxu0 0.0
    %1415 = vmatprep.subr.mxu0 0.0
    %1416 = vmatpush1.msra.mxu0 0.0
    %1417 = vmatprep.subr.mxu0 0.0
    %1418 = vmatpush1.msra.mxu0 0.0
    %1419 = vmatprep.subr.mxu0 0.0
    %1420 = vmatpush1.msra.mxu0 0.0
    %1421 = vmatprep.subr.mxu0 0.0
    %1422 = vmatpush1.msra.mxu0 0.0
    %1423 = vmatprep.subr.mxu0 0.0
    %1424 = vmatpush1.msra.mxu0 0.0
    %1425 = vmatprep.subr.mxu0 0.0
    %1426 = vmatpush1.msra.mxu0 0.0
    %1427 = vmatprep.subr.mxu0 0.0
    %1428 = vmatpush1.msra.mxu0 0.0
    %1429 = vmatprep.subr.mxu0 0.0
    %1430 = vmatpush1.msra.mxu0 0.0
    %1431 = vmatprep.subr.mxu0 0.0
    %1432 = vmatpush1.msra.mxu0 0.0
    %1433 = vmatprep.subr.mxu0 0.0
    %1434 = vmatpush1.msra.mxu0 0.0
    %1435 = vmatprep.subr.mxu0 0.0
    %1436 = vmatpush1.msra.mxu0 0.0
    %1437 = vmatprep.subr.mxu0 0.0
    %1438 = vmatpush1.msra.mxu0 0.0
    %1439 = vmatprep.subr.mxu0 0.0
    %1440 = vmatpush1.msra.mxu0 0.0
    %1441 = vmatprep.subr.mxu0 0.0
    %1442 = vmatpush1.msra.mxu0 0.0
    %1443 = vmatprep.subr.mxu0 0.0
    %1444 = vmatpush1.msra.mxu0 0.0
    %1445 = vmatprep.subr.mxu0 0.0
    %1446 = vmatpush1.msra.mxu0 0.0
    %1447 = vmatprep.mubr.f32.mxu0 0.0
    %1448 = vmatmul.mubr.f32.gmra.mrb[0].mxu0 %v1378
    %v1449 = vpop.f32.mrb[0].mxu0
    %v1450 = vadd.f32 0.0, %v1449
    %v1451 = vpop.f32.mrb[0].mxu0
    %1452 = vmatprep.mubr.f32.mxu0 0.0
    %1453 = vmatmul.mubr.f32.gmra.mrb[0].mxu0 %v1381
    %v1454 = vpop.f32.mrb[0].mxu0
    %v1455 = vadd.f32 0.0, %v1454
    %v1456 = vpop.f32.mrb[0].mxu0
    %1457 = vdwg.mxu0
    %v1458 = vmul.f32 %v1276, 1.1
    %v1459 = vmul.f32 %v1281, 1.1
    %v1460 = vmul.f32 %v1450, 0.1
    %v1461 = vmul.f32 %v1455, 0.1
    %v1462 = vsub.f32 %v1458, %v1460
    %v1463 = vsub.f32 %v1459, %v1461
    %v1464 = vmul.f32 %v1462, 0.5
    %v1465 = vmul.f32 %v1463, 0.5
    %v1466 = vadd.f32 %v706, %v1464
    %v1467 = vadd.f32 %v707, %v1465
    %v1468 = vtanh.pop %v1466
    %v1469 = vtanh.pop %v1467
    %1470 = vst [vmem:[#allocation2] sm:$0xff] %v1276
    %1471 = vst [vmem:[#allocation2 + $0x8] sm:$0xff] %v1281
    %1472 = vst.msk [vmem:[#allocation2] sm:$0xff] %vm303, %v1468
    %1473 = vst.msk [vmem:[#allocation2 + $0x8] sm:$0xff] %vm303, %v1469
    %v1474 = vld [vmem:[#allocation2] sm:$0xff]
    %v1475 = vld [vmem:[#allocation2 + $0x8] sm:$0xff]
    %v1477 = vsel %vm303, %v1468, 0
    %v1480 = vsel %vm303, %v1469, 0
    %1482 = vmatprep.subr.mxu0 0.0
    %1483 = vmatpush1.msra.mxu0 %v24
    %1484 = vmatprep.subr.mxu0 0.0
    %1485 = vmatpush1.msra.mxu0 %v25
    %1486 = vmatprep.subr.mxu0 0.0
    %1487 = vmatpush1.msra.mxu0 0.0
    %1488 = vmatprep.subr.mxu0 0.0
    %1489 = vmatpush1.msra.mxu0 0.0
    %1490 = vmatprep.subr.mxu0 0.0
    %1491 = vmatpush1.msra.mxu0 0.0
    %1492 = vmatprep.subr.mxu0 0.0
    %1493 = vmatpush1.msra.mxu0 0.0
    %1494 = vmatprep.subr.mxu0 0.0
    %1495 = vmatpush1.msra.mxu0 0.0
    %1496 = vmatprep.subr.mxu0 0.0
    %1497 = vmatpush1.msra.mxu0 0.0
    %1498 = vmatprep.subr.mxu0 0.0
    %1499 = vmatpush1.msra.mxu0 0.0
    %1500 = vmatprep.subr.mxu0 0.0
    %1501 = vmatpush1.msra.mxu0 0.0
    %1502 = vmatprep.subr.mxu0 0.0
    %1503 = vmatpush1.msra.mxu0 0.0
    %1504 = vmatprep.subr.mxu0 0.0
    %1505 = vmatpush1.msra.mxu0 0.0
    %1506 = vmatprep.subr.mxu0 0.0
    %1507 = vmatpush1.msra.mxu0 0.0
    %1508 = vmatprep.subr.mxu0 0.0
    %1509 = vmatpush1.msra.mxu0 0.0
    %1510 = vmatprep.subr.mxu0 0.0
    %1511 = vmatpush1.msra.mxu0 0.0
    %1512 = vmatprep.subr.mxu0 0.0
    %1513 = vmatpush1.msra.mxu0 0.0
    %1514 = vmatprep.subr.mxu0 0.0
    %1515 = vmatpush1.msra.mxu0 0.0
    %1516 = vmatprep.subr.mxu0 0.0
    %1517 = vmatpush1.msra.mxu0 0.0
    %1518 = vmatprep.subr.mxu0 0.0
    %1519 = vmatpush1.msra.mxu0 0.0
    %1520 = vmatprep.subr.mxu0 0.0
    %1521 = vmatpush1.msra.mxu0 0.0
    %1522 = vmatprep.subr.mxu0 0.0
    %1523 = vmatpush1.msra.mxu0 0.0
    %1524 = vmatprep.subr.mxu0 0.0
    %1525 = vmatpush1.msra.mxu0 0.0
    %1526 = vmatprep.subr.mxu0 0.0
    %1527 = vmatpush1.msra.mxu0 0.0
    %1528 = vmatprep.subr.mxu0 0.0
    %1529 = vmatpush1.msra.mxu0 0.0
    %1530 = vmatprep.subr.mxu0 0.0
    %1531 = vmatpush1.msra.mxu0 0.0
    %1532 = vmatprep.subr.mxu0 0.0
    %1533 = vmatpush1.msra.mxu0 0.0
    %1534 = vmatprep.subr.mxu0 0.0
    %1535 = vmatpush1.msra.mxu0 0.0
    %1536 = vmatprep.subr.mxu0 0.0
    %1537 = vmatpush1.msra.mxu0 0.0
    %1538 = vmatprep.subr.mxu0 0.0
    %1539 = vmatpush1.msra.mxu0 0.0
    %1540 = vmatprep.subr.mxu0 0.0
    %1541 = vmatpush1.msra.mxu0 0.0
    %1542 = vmatprep.subr.mxu0 0.0
    %1543 = vmatpush1.msra.mxu0 0.0
    %1544 = vmatprep.subr.mxu0 0.0
    %1545 = vmatpush1.msra.mxu0 0.0
    %1546 = vmatprep.mubr.f32.mxu0 0.0
    %1547 = vmatmul.mubr.f32.gmra.mrb[0].mxu0 %v1477
    %v1548 = vpop.f32.mrb[0].mxu0
    %v1549 = vadd.f32 0.0, %v1548
    %v1550 = vpop.f32.mrb[0].mxu0
    %1551 = vmatprep.mubr.f32.mxu0 0.0
    %1552 = vmatmul.mubr.f32.gmra.mrb[0].mxu0 %v1480
    %v1553 = vpop.f32.mrb[0].mxu0
    %v1554 = vadd.f32 0.0, %v1553
    %v1555 = vpop.f32.mrb[0].mxu0
    %1556 = vdwg.mxu0
    %v1557 = vadd.f32 %v1549, %v35
    %v1558 = vadd.f32 %v1554, %v35
    %v1559 = vadd.f32 %v1549, %v411
    %v1560 = vadd.f32 %v1554, %v411
    %v1561 = vtanh.pop %v1559
    %v1562 = vtanh.pop %v1560
    %1565 = vrot.lane.b32.xlu0 %v1561, 112
    %v1566 = vpop.permute.xlu0 %1565
    %1567 = vrot.lane.b32.xlu0 %v1562, 112
    %v1568 = vpop.permute.xlu0 %1567
    %v1571 = vmul.f32 %v420, %v1566
    %v1572 = vmul.f32 %v420, %v1568
    %1574 = vset.pattern.permute.xlu0 3
    %1575 = vperm.xlu0 %1574, %v1571
    %v1576 = vpop.permute.xlu0 %1575
    %1579 = vset.pattern.permute.xlu0 3
    %1580 = vperm.xlu0 %1579, %v1572
    %v1581 = vpop.permute.xlu0 %1580
    %v1583 = vmul.f32 %v1576, %v1474
    %v1584 = vmul.f32 %v1581, %v1475
    %v1585 = vadd.f32 %v1207, %v1583
    %v1586 = vadd.f32 %v1208, %v1584
    %1587 = vmatprep.subr.mxu0 0.0
    %1588 = vmatpush1.msra.mxu0 %v1474
    %1589 = vmatprep.subr.mxu0 0.0
    %1590 = vmatpush1.msra.mxu0 %v1475
    %1591 = vmatprep.subr.mxu0 0.0
    %1592 = vmatpush1.msra.mxu0 0.0
    %1593 = vmatprep.subr.mxu0 0.0
    %1594 = vmatpush1.msra.mxu0 0.0
    %1595 = vmatprep.subr.mxu0 0.0
    %1596 = vmatpush1.msra.mxu0 0.0
    %1597 = vmatprep.subr.mxu0 0.0
    %1598 = vmatpush1.msra.mxu0 0.0
    %1599 = vmatprep.subr.mxu0 0.0
    %1600 = vmatpush1.msra.mxu0 0.0
    %1601 = vmatprep.subr.mxu0 0.0
    %1602 = vmatpush1.msra.mxu0 0.0
    %1603 = vmatprep.subr.mxu0 0.0
    %1604 = vmatpush1.msra.mxu0 0.0
    %1605 = vmatprep.subr.mxu0 0.0
    %1606 = vmatpush1.msra.mxu0 0.0
    %1607 = vmatprep.subr.mxu0 0.0
    %1608 = vmatpush1.msra.mxu0 0.0
    %1609 = vmatprep.subr.mxu0 0.0
    %1610 = vmatpush1.msra.mxu0 0.0
    %1611 = vmatprep.subr.mxu0 0.0
    %1612 = vmatpush1.msra.mxu0 0.0
    %1613 = vmatprep.subr.mxu0 0.0
    %1614 = vmatpush1.msra.mxu0 0.0
    %1615 = vmatprep.subr.mxu0 0.0
    %1616 = vmatpush1.msra.mxu0 0.0
    %1617 = vmatprep.subr.mxu0 0.0
    %1618 = vmatpush1.msra.mxu0 0.0
    %1619 = vmatprep.subr.mxu0 0.0
    %1620 = vmatpush1.msra.mxu0 0.0
    %1621 = vmatprep.subr.mxu0 0.0
    %1622 = vmatpush1.msra.mxu0 0.0
    %1623 = vmatprep.subr.mxu0 0.0
    %1624 = vmatpush1.msra.mxu0 0.0
    %1625 = vmatprep.subr.mxu0 0.0
    %1626 = vmatpush1.msra.mxu0 0.0
    %1627 = vmatprep.subr.mxu0 0.0
    %1628 = vmatpush1.msra.mxu0 0.0
    %1629 = vmatprep.subr.mxu0 0.0
    %1630 = vmatpush1.msra.mxu0 0.0
    %1631 = vmatprep.subr.mxu0 0.0
    %1632 = vmatpush1.msra.mxu0 0.0
    %1633 = vmatprep.subr.mxu0 0.0
    %1634 = vmatpush1.msra.mxu0 0.0
    %1635 = vmatprep.subr.mxu0 0.0
    %1636 = vmatpush1.msra.mxu0 0.0
    %1637 = vmatprep.subr.mxu0 0.0
    %1638 = vmatpush1.msra.mxu0 0.0
    %1639 = vmatprep.subr.mxu0 0.0
    %1640 = vmatpush1.msra.mxu0 0.0
    %1641 = vmatprep.subr.mxu0 0.0
    %1642 = vmatpush1.msra.mxu0 0.0
    %1643 = vmatprep.subr.mxu0 0.0
    %1644 = vmatpush1.msra.mxu0 0.0
    %1645 = vmatprep.subr.mxu0 0.0
    %1646 = vmatpush1.msra.mxu0 0.0
    %1647 = vmatprep.subr.mxu0 0.0
    %1648 = vmatpush1.msra.mxu0 0.0
    %1649 = vmatprep.subr.mxu0 0.0
    %1650 = vmatpush1.msra.mxu0 0.0
    %1651 = vmatprep.mubr.f32.mxu0 0.0
    %1652 = vmatmul.mubr.f32.gmra.mrb[0].mxu0 %v446
    %v1653 = vpop.f32.mrb[0].mxu0
    %v1654 = vadd.f32 0.0, %v1653
    %v1655 = vpop.f32.mrb[0].mxu0
    %1656 = vmatprep.mubr.f32.mxu0 0.0
    %1657 = vmatmul.mubr.f32.gmra.mrb[0].mxu0 %v449
    %v1658 = vpop.f32.mrb[0].mxu0
    %v1659 = vadd.f32 0.0, %v1658
    %v1660 = vpop.f32.mrb[0].mxu0
    %1661 = vdwg.mxu0
    %v1663 = vsel %vm303, %v1557, 0
    %v1666 = vsel %vm303, %v1558, 0
    %1668 = vmatprep.subr.mxu0 0.0
    %1669 = vmatpush1.xpose.msra.mxu0 %v1663
    %1670 = vmatprep.subr.mxu0 0.0
    %1671 = vmatpush1.xpose.msra.mxu0 %v1666
    %1672 = vmatprep.subr.mxu0 0.0
    %1673 = vmatpush1.xpose.msra.mxu0 0.0
    %1674 = vmatprep.subr.mxu0 0.0
    %1675 = vmatpush1.xpose.msra.mxu0 0.0
    %1676 = vmatprep.subr.mxu0 0.0
    %1677 = vmatpush1.xpose.msra.mxu0 0.0
    %1678 = vmatprep.subr.mxu0 0.0
    %1679 = vmatpush1.xpose.msra.mxu0 0.0
    %1680 = vmatprep.subr.mxu0 0.0
    %1681 = vmatpush1.xpose.msra.mxu0 0.0
    %1682 = vmatprep.subr.mxu0 0.0
    %1683 = vmatpush1.xpose.msra.mxu0 0.0
    %1684 = vmatprep.subr.mxu0 0.0
    %1685 = vmatpush1.xpose.msra.mxu0 0.0
    %1686 = vmatprep.subr.mxu0 0.0
    %1687 = vmatpush1.xpose.msra.mxu0 0.0
    %1688 = vmatprep.subr.mxu0 0.0
    %1689 = vmatpush1.xpose.msra.mxu0 0.0
    %1690 = vmatprep.subr.mxu0 0.0
    %1691 = vmatpush1.xpose.msra.mxu0 0.0
    %1692 = vmatprep.subr.mxu0 0.0
    %1693 = vmatpush1.xpose.msra.mxu0 0.0
    %1694 = vmatprep.subr.mxu0 0.0
    %1695 = vmatpush1.xpose.msra.mxu0 0.0
    %1696 = vmatprep.subr.mxu0 0.0
    %1697 = vmatpush1.xpose.msra.mxu0 0.0
    %1698 = vmatprep.subr.mxu0 0.0
    %1699 = vmatpush1.xpose.msra.mxu0 0.0
    %1700 = vmatprep.subr.mxu0 0.0
    %1701 = vmatpush1.xpose.msra.mxu0 0.0
    %1702 = vmatprep.subr.mxu0 0.0
    %1703 = vmatpush1.xpose.msra.mxu0 0.0
    %1704 = vmatprep.subr.mxu0 0.0
    %1705 = vmatpush1.xpose.msra.mxu0 0.0
    %1706 = vmatprep.subr.mxu0 0.0
    %1707 = vmatpush1.xpose.msra.mxu0 0.0
    %1708 = vmatprep.subr.mxu0 0.0
    %1709 = vmatpush1.xpose.msra.mxu0 0.0
    %1710 = vmatprep.subr.mxu0 0.0
    %1711 = vmatpush1.xpose.msra.mxu0 0.0
    %1712 = vmatprep.subr.mxu0 0.0
    %1713 = vmatpush1.xpose.msra.mxu0 0.0
    %1714 = vmatprep.subr.mxu0 0.0
    %1715 = vmatpush1.xpose.msra.mxu0 0.0
    %1716 = vmatprep.subr.mxu0 0.0
    %1717 = vmatpush1.xpose.msra.mxu0 0.0
    %1718 = vmatprep.subr.mxu0 0.0
    %1719 = vmatpush1.xpose.msra.mxu0 0.0
    %1720 = vmatprep.subr.mxu0 0.0
    %1721 = vmatpush1.xpose.msra.mxu0 0.0
    %1722 = vmatprep.subr.mxu0 0.0
    %1723 = vmatpush1.xpose.msra.mxu0 0.0
    %1724 = vmatprep.subr.mxu0 0.0
    %1725 = vmatpush1.xpose.msra.mxu0 0.0
    %1726 = vmatprep.subr.mxu0 0.0
    %1727 = vmatpush1.xpose.msra.mxu0 0.0
    %1728 = vmatprep.subr.mxu0 0.0
    %1729 = vmatpush1.xpose.msra.mxu0 0.0
    %1730 = vmatprep.subr.mxu0 0.0
    %1731 = vmatpush1.xpose.msra.mxu0 0.0
    %1732 = vmatprep.mubr.f32.mxu0 0.0
    %1733 = vmatmul.mubr.f32.gmra.mrb[0].mxu0 %v1663
    %v1734 = vpop.f32.mrb[0].mxu0
    %v1735 = vadd.f32 0.0, %v1734
    %v1736 = vpop.f32.mrb[0].mxu0
    %1737 = vmatprep.mubr.f32.mxu0 0.0
    %1738 = vmatmul.mubr.f32.gmra.mrb[0].mxu0 %v1666
    %v1739 = vpop.f32.mrb[0].mxu0
    %v1740 = vadd.f32 0.0, %v1739
    %v1741 = vpop.f32.mrb[0].mxu0
    %1742 = vdwg.mxu0
    %v1743 = vxor.u32 %v1735, 2147483648
    %v1744 = vxor.u32 %v1740, 2147483648
    %v1745 = vmul.f32 %v1743, 1.442695
    %v1746 = vpow.pop %v1745
    %v1747 = vmul.f32 %v1744, 1.442695
    %v1748 = vpow.pop %v1747
    %v1749 = vadd.f32 %v1746, 1.0
    %v1750 = vadd.f32 %v1748, 1.0
    %v1751 = vrcp.pop %v1749
    %v1752 = vmul.f32 1.0, %v1751
    %v1753 = vrcp.pop %v1750
    %v1754 = vmul.f32 1.0, %v1753
    %v1756 = vsel %vm303, %v1752, 0
    %v1759 = vsel %vm303, %v1754, 0
    %1761 = vmatprep.subr.mxu0 0.0
    %1762 = vmatpush1.msra.mxu0 %v1468
    %1763 = vmatprep.subr.mxu0 0.0
    %1764 = vmatpush1.msra.mxu0 %v1469
    %1765 = vmatprep.subr.mxu0 0.0
    %1766 = vmatpush1.msra.mxu0 0.0
    %1767 = vmatprep.subr.mxu0 0.0
    %1768 = vmatpush1.msra.mxu0 0.0
    %1769 = vmatprep.subr.mxu0 0.0
    %1770 = vmatpush1.msra.mxu0 0.0
    %1771 = vmatprep.subr.mxu0 0.0
    %1772 = vmatpush1.msra.mxu0 0.0
    %1773 = vmatprep.subr.mxu0 0.0
    %1774 = vmatpush1.msra.mxu0 0.0
    %1775 = vmatprep.subr.mxu0 0.0
    %1776 = vmatpush1.msra.mxu0 0.0
    %1777 = vmatprep.subr.mxu0 0.0
    %1778 = vmatpush1.msra.mxu0 0.0
    %1779 = vmatprep.subr.mxu0 0.0
    %1780 = vmatpush1.msra.mxu0 0.0
    %1781 = vmatprep.subr.mxu0 0.0
    %1782 = vmatpush1.msra.mxu0 0.0
    %1783 = vmatprep.subr.mxu0 0.0
    %1784 = vmatpush1.msra.mxu0 0.0
    %1785 = vmatprep.subr.mxu0 0.0
    %1786 = vmatpush1.msra.mxu0 0.0
    %1787 = vmatprep.subr.mxu0 0.0
    %1788 = vmatpush1.msra.mxu0 0.0
    %1789 = vmatprep.subr.mxu0 0.0
    %1790 = vmatpush1.msra.mxu0 0.0
    %1791 = vmatprep.subr.mxu0 0.0
    %1792 = vmatpush1.msra.mxu0 0.0
    %1793 = vmatprep.subr.mxu0 0.0
    %1794 = vmatpush1.msra.mxu0 0.0
    %1795 = vmatprep.subr.mxu0 0.0
    %1796 = vmatpush1.msra.mxu0 0.0
    %1797 = vmatprep.subr.mxu0 0.0
    %1798 = vmatpush1.msra.mxu0 0.0
    %1799 = vmatprep.subr.mxu0 0.0
    %1800 = vmatpush1.msra.mxu0 0.0
    %1801 = vmatprep.subr.mxu0 0.0
    %1802 = vmatpush1.msra.mxu0 0.0
    %1803 = vmatprep.subr.mxu0 0.0
    %1804 = vmatpush1.msra.mxu0 0.0
    %1805 = vmatprep.subr.mxu0 0.0
    %1806 = vmatpush1.msra.mxu0 0.0
    %1807 = vmatprep.subr.mxu0 0.0
    %1808 = vmatpush1.msra.mxu0 0.0
    %1809 = vmatprep.subr.mxu0 0.0
    %1810 = vmatpush1.msra.mxu0 0.0
    %1811 = vmatprep.subr.mxu0 0.0
    %1812 = vmatpush1.msra.mxu0 0.0
    %1813 = vmatprep.subr.mxu0 0.0
    %1814 = vmatpush1.msra.mxu0 0.0
    %1815 = vmatprep.subr.mxu0 0.0
    %1816 = vmatpush1.msra.mxu0 0.0
    %1817 = vmatprep.subr.mxu0 0.0
    %1818 = vmatpush1.msra.mxu0 0.0
    %1819 = vmatprep.subr.mxu0 0.0
    %1820 = vmatpush1.msra.mxu0 0.0
    %1821 = vmatprep.subr.mxu0 0.0
    %1822 = vmatpush1.msra.mxu0 0.0
    %1823 = vmatprep.subr.mxu0 0.0
    %1824 = vmatpush1.msra.mxu0 0.0
    %1825 = vmatprep.mubr.f32.mxu0 0.0
    %1826 = vmatmul.mubr.f32.gmra.mrb[0].mxu0 %v1756
    %v1827 = vpop.f32.mrb[0].mxu0
    %v1828 = vadd.f32 0.0, %v1827
    %v1829 = vpop.f32.mrb[0].mxu0
    %1830 = vmatprep.mubr.f32.mxu0 0.0
    %1831 = vmatmul.mubr.f32.gmra.mrb[0].mxu0 %v1759
    %v1832 = vpop.f32.mrb[0].mxu0
    %v1833 = vadd.f32 0.0, %v1832
    %v1834 = vpop.f32.mrb[0].mxu0
    %1835 = vdwg.mxu0
    %v1836 = vmul.f32 %v1654, 1.1
    %v1837 = vmul.f32 %v1659, 1.1
    %v1838 = vmul.f32 %v1828, 0.1
    %v1839 = vmul.f32 %v1833, 0.1
    %v1840 = vsub.f32 %v1836, %v1838
    %v1841 = vsub.f32 %v1837, %v1839
    %v1842 = vmul.f32 %v1840, 0.5
    %v1843 = vmul.f32 %v1841, 0.5
    %v1844 = vadd.f32 %v706, %v1842
    %v1845 = vadd.f32 %v707, %v1843
    %v1846 = vtanh.pop %v1844
    %v1847 = vtanh.pop %v1845
    %1848 = vst [vmem:[#allocation2] sm:$0xff] %v1654
    %1849 = vst [vmem:[#allocation2 + $0x8] sm:$0xff] %v1659
    %1850 = vst.msk [vmem:[#allocation2] sm:$0xff] %vm303, %v1846
    %1851 = vst.msk [vmem:[#allocation2 + $0x8] sm:$0xff] %vm303, %v1847
    %v1852 = vld [vmem:[#allocation2] sm:$0xff]
    %v1853 = vld [vmem:[#allocation2 + $0x8] sm:$0xff]
    %1856 = vrot.lane.b32.xlu0 %v24, 108
    %v1857 = vpop.permute.xlu0 %1856
    %1858 = vrot.lane.b32.xlu0 %v25, 108
    %v1859 = vpop.permute.xlu0 %1858
    %1862 = vrot.lane.b32.xlu0 %v408, 124
    %v1863 = vpop.permute.xlu0 %1862
    %v1866 = vsel %vm303, %v1846, 0
    %v1869 = vsel %vm303, %v1847, 0
    %1871 = vmatprep.subr.mxu0 0.0
    %1872 = vmatpush1.msra.mxu0 %v1857
    %1873 = vmatprep.subr.mxu0 0.0
    %1874 = vmatpush1.msra.mxu0 %v1859
    %1875 = vmatprep.subr.mxu0 0.0
    %1876 = vmatpush1.msra.mxu0 0.0
    %1877 = vmatprep.subr.mxu0 0.0
    %1878 = vmatpush1.msra.mxu0 0.0
    %1879 = vmatprep.subr.mxu0 0.0
    %1880 = vmatpush1.msra.mxu0 0.0
    %1881 = vmatprep.subr.mxu0 0.0
    %1882 = vmatpush1.msra.mxu0 0.0
    %1883 = vmatprep.subr.mxu0 0.0
    %1884 = vmatpush1.msra.mxu0 0.0
    %1885 = vmatprep.subr.mxu0 0.0
    %1886 = vmatpush1.msra.mxu0 0.0
    %1887 = vmatprep.subr.mxu0 0.0
    %1888 = vmatpush1.msra.mxu0 0.0
    %1889 = vmatprep.subr.mxu0 0.0
    %1890 = vmatpush1.msra.mxu0 0.0
    %1891 = vmatprep.subr.mxu0 0.0
    %1892 = vmatpush1.msra.mxu0 0.0
    %1893 = vmatprep.subr.mxu0 0.0
    %1894 = vmatpush1.msra.mxu0 0.0
    %1895 = vmatprep.subr.mxu0 0.0
    %1896 = vmatpush1.msra.mxu0 0.0
    %1897 = vmatprep.subr.mxu0 0.0
    %1898 = vmatpush1.msra.mxu0 0.0
    %1899 = vmatprep.subr.mxu0 0.0
    %1900 = vmatpush1.msra.mxu0 0.0
    %1901 = vmatprep.subr.mxu0 0.0
    %1902 = vmatpush1.msra.mxu0 0.0
    %1903 = vmatprep.subr.mxu0 0.0
    %1904 = vmatpush1.msra.mxu0 0.0
    %1905 = vmatprep.subr.mxu0 0.0
    %1906 = vmatpush1.msra.mxu0 0.0
    %1907 = vmatprep.subr.mxu0 0.0
    %1908 = vmatpush1.msra.mxu0 0.0
    %1909 = vmatprep.subr.mxu0 0.0
    %1910 = vmatpush1.msra.mxu0 0.0
    %1911 = vmatprep.subr.mxu0 0.0
    %1912 = vmatpush1.msra.mxu0 0.0
    %1913 = vmatprep.subr.mxu0 0.0
    %1914 = vmatpush1.msra.mxu0 0.0
    %1915 = vmatprep.subr.mxu0 0.0
    %1916 = vmatpush1.msra.mxu0 0.0
    %1917 = vmatprep.subr.mxu0 0.0
    %1918 = vmatpush1.msra.mxu0 0.0
    %1919 = vmatprep.subr.mxu0 0.0
    %1920 = vmatpush1.msra.mxu0 0.0
    %1921 = vmatprep.subr.mxu0 0.0
    %1922 = vmatpush1.msra.mxu0 0.0
    %1923 = vmatprep.subr.mxu0 0.0
    %1924 = vmatpush1.msra.mxu0 0.0
    %1925 = vmatprep.subr.mxu0 0.0
    %1926 = vmatpush1.msra.mxu0 0.0
    %1927 = vmatprep.subr.mxu0 0.0
    %1928 = vmatpush1.msra.mxu0 0.0
    %1929 = vmatprep.subr.mxu0 0.0
    %1930 = vmatpush1.msra.mxu0 0.0
    %1931 = vmatprep.subr.mxu0 0.0
    %1932 = vmatpush1.msra.mxu0 0.0
    %1933 = vmatprep.subr.mxu0 0.0
    %1934 = vmatpush1.msra.mxu0 0.0
    %1935 = vmatprep.mubr.f32.mxu0 0.0
    %1936 = vmatmul.mubr.f32.gmra.mrb[0].mxu0 %v1866
    %v1937 = vpop.f32.mrb[0].mxu0
    %v1938 = vadd.f32 %v1863, %v1937
    %v1939 = vpop.f32.mrb[0].mxu0
    %1940 = vmatprep.mubr.f32.mxu0 0.0
    %1941 = vmatmul.mubr.f32.gmra.mrb[0].mxu0 %v1869
    %v1942 = vpop.f32.mrb[0].mxu0
    %v1943 = vadd.f32 %v1863, %v1942
    %v1944 = vpop.f32.mrb[0].mxu0
    %1945 = vdwg.mxu0
    %v1946 = vtanh.pop %v1938
    %v1947 = vtanh.pop %v1943
    %1950 = vrot.lane.b32.xlu0 %v1946, 4
    %v1951 = vpop.permute.xlu0 %1950
    %1952 = vrot.lane.b32.xlu0 %v1947, 4
    %v1953 = vpop.permute.xlu0 %1952
    %v1956 = vmul.f32 %v420, %v1951
    %v1957 = vmul.f32 %v420, %v1953
    %1959 = vset.pattern.permute.xlu0 4
    %1960 = vperm.xlu0 %1959, %v1956
    %v1961 = vpop.permute.xlu0 %1960
    %1964 = vset.pattern.permute.xlu0 4
    %1965 = vperm.xlu0 %1964, %v1957
    %v1966 = vpop.permute.xlu0 %1965
    %v1968 = vmul.f32 %v1961, %v1852
    %v1969 = vmul.f32 %v1966, %v1853
    %v1970 = vadd.f32 %v1585, %v1968
    %v1971 = vadd.f32 %v1586, %v1969
    %1972 = vst [vmem:[#allocation3] sm:$0xff] %v1970
    %1973 = vst [vmem:[#allocation3 + $0x8] sm:$0xff] %v1971
    %1974 = vst.msk [vmem:[#allocation3] sm:$0xff] %vm303, %v1846
    %1975 = vst.msk [vmem:[#allocation3 + $0x8] sm:$0xff] %vm303, %v1847
    // Predicated region
    $region18: #{tpu_custom_call.1} parent=1 // pred_check
      _
    $region19: #{tpu_custom_call.1} parent=1 // pred_check_branch
      %1977 = sbr.rel (0) target = $region21
    $region20: #{tpu_custom_call.1} parent=1 // pred_region
      %s1979 = ssub.s32 256, 256
      %1980 = vsyncadd [#allocation4], %s1979
      %s1981 = sshll.u32 [#allocation3], 4
      %s1982 = int_to_ptr.vmem [resolvable:$true] %s1981
      %1987 = dma.vmem_to_hbm [thread:$0]  %s1982, 256, %s4, [#allocation4], 128, 128, 8
    $region21: #{tpu_custom_call.1} parent=1 // pred_fallthru
      _
    // Predicated region
    $region22: #{tpu_custom_call.1} parent=1 // pred_check
      _
    $region23: #{tpu_custom_call.1} parent=1 // pred_check_branch
      %1989 = sbr.rel (0) target = $region25
    $region24: #{tpu_custom_call.1} parent=1 // pred_region
      %1990 = dma.done [#allocation4], 256
    $region25: #{tpu_custom_call.1} parent=1 // pred_fallthru
      _
    %1991 = vsyncpa [#allocation4], 1

</llo_original>
